<compile_context>
chip_gen: v7x
topology: tpu7x:2x2x1
jax: 0.10.0
libtpu: 0.0.40
codegen_flags: <defaults>
</compile_context>

<pallas_src>
import math
import jax
import jax.numpy as jnp
from jax.experimental import pallas as pl
from jax.experimental.pallas import tpu as pltpu

HIDDEN = 512
NUM_CLASS = 10
NUM_CLASS_PAD = 128   # lane-dense padding of the final layer


def cloud_classifier_kernel(x_ref, w1_ref, b1_ref, w2_ref, b2_ref, w3_ref, b3_ref, o_ref):
    """Fused 3-layer MLP: (Dropout->)Linear->ReLU->(Dropout->)Linear->ReLU->Linear.

    Weights are bf16, biases f32, accumulation f32 (MXU native bf16 path).
    """
    x = x_ref[...].astype(jnp.bfloat16)

    h = jnp.dot(x, w1_ref[...], preferred_element_type=jnp.float32) + b1_ref[...]
    h = jnp.maximum(h, 0.0)                                            # ReLU(True)

    h = jnp.dot(h.astype(jnp.bfloat16), w2_ref[...],
                preferred_element_type=jnp.float32) + b2_ref[...]
    h = jnp.maximum(h, 0.0)                                            # ReLU(True)

    out = jnp.dot(h.astype(jnp.bfloat16), w3_ref[...],
                  preferred_element_type=jnp.float32) + b3_ref[...]
    o_ref[...] = out.astype(o_ref.dtype)


def init_linear(key, in_f, out_f):
    """PyTorch nn.Linear default init: U(-1/sqrt(in), 1/sqrt(in)) for weight and bias."""
    kw, kb = jax.random.split(key)
    bound = 1.0 / math.sqrt(in_f)
    # stored as (in_features, out_features) so the kernel computes x @ W
    w = jax.random.uniform(kw, (in_f, out_f), jnp.float32, minval=-bound, maxval=bound)
    b = jax.random.uniform(kb, (1, out_f), jnp.float32, minval=-bound, maxval=bound)
    return w, b


def make_cloud_params(key, num_class=NUM_CLASS):
    """Build (bf16 weights, f32 biases), with the last layer zero-padded to 128 cols."""
    k1, k2, k3 = jax.random.split(key, 3)
    w1, b1 = init_linear(k1, HIDDEN, HIDDEN)
    w2, b2 = init_linear(k2, HIDDEN, HIDDEN)
    w3, b3 = init_linear(k3, HIDDEN, num_class)

    # Pad final layer to lane-dense width (zeros in the padded columns).
    w3p = jnp.zeros((HIDDEN, NUM_CLASS_PAD), jnp.float32).at[:, :num_class].set(w3)
    b3p = jnp.zeros((1, NUM_CLASS_PAD), jnp.float32).at[:, :num_class].set(b3)

    # bf16 weights (cast once here, not per call); biases stay f32.
    return (w1.astype(jnp.bfloat16), b1,
            w2.astype(jnp.bfloat16), b2,
            w3p.astype(jnp.bfloat16), b3p)


def cloud_forward(x_nchw, params, num_class=NUM_CLASS):
    # head: the wrapped `model` is supplied externally and is not part of Cloud;
    # identity is used here so the synthetic input is already the feature map.
    # TODO(synk): plug a real VGG feature-extractor head (ideally fused into this kernel).
    B = x_nchw.shape[0]
    x = x_nchw.reshape(B, -1)                                  # x.view(x.size(0), -1) -> (B, 512)
    assert x.shape[1] == HIDDEN

    w1, b1, w2, b2, w3p, b3p = params
    n_pad = w3p.shape[1]

    # Batch tile: multiples of 256 fill whole MXU passes on v6e/v7x; for small
    # batches just round up to the f32 sublane (8).
    if B >= 256:
        tm = 256
    else:
        tm = max(8, ((B + 7) // 8) * 8)
    b_pad = pl.cdiv(B, tm) * tm
    if b_pad != B:
        x = jnp.pad(x, ((0, b_pad - B), (0, 0)))

    weight_bytes = (w1.size + w2.size + w3p.size) * 2 + (b1.size + b2.size + b3p.size) * 4
    cost = pl.CostEstimate(
        flops=2 * b_pad * HIDDEN * (HIDDEN + HIDDEN + n_pad),
        transcendentals=0,
        bytes_accessed=weight_bytes + b_pad * HIDDEN * 4 + b_pad * n_pad * 4,
    )

    out = pl.pallas_call(
        cloud_classifier_kernel,
        out_shape=jax.ShapeDtypeStruct((b_pad, n_pad), jnp.float32),
        grid=(b_pad // tm,),
        in_specs=[
            pl.BlockSpec((tm, HIDDEN), lambda i: (i, 0)),      # batch-tiled activations
            pl.BlockSpec(w1.shape, lambda i: (0, 0)),          # weights stay VMEM-resident
            pl.BlockSpec(b1.shape, lambda i: (0, 0)),
            pl.BlockSpec(w2.shape, lambda i: (0, 0)),
            pl.BlockSpec(b2.shape, lambda i: (0, 0)),
            pl.BlockSpec(w3p.shape, lambda i: (0, 0)),
            pl.BlockSpec(b3p.shape, lambda i: (0, 0)),
        ],
        out_specs=pl.BlockSpec((tm, n_pad), lambda i: (i, 0)),
        compiler_params=pltpu.CompilerParams(
            dimension_semantics=("parallel",)),                # v7x: 2 TCs split the batch
        cost_estimate=cost,
    )(x, w1, b1, w2, b2, w3p, b3p)

    return out[:B, :num_class]


def cloud_forward_ref(x_nchw, params, num_class=NUM_CLASS):
    """Pure-JAX reference mirroring the kernel numerics (bf16 operands, f32 accum)."""
    B = x_nchw.shape[0]
    x = x_nchw.reshape(B, -1)
    w1, b1, w2, b2, w3p, b3p = params
    h = jnp.dot(x.astype(jnp.bfloat16), w1, preferred_element_type=jnp.float32) + b1
    h = jnp.maximum(h, 0.0)
    h = jnp.dot(h.astype(jnp.bfloat16), w2, preferred_element_type=jnp.float32) + b2
    h = jnp.maximum(h, 0.0)
    out = jnp.dot(h.astype(jnp.bfloat16), w3p, preferred_element_type=jnp.float32) + b3p
    return out[:, :num_class]


if __name__ == "__main__":
    key = jax.random.PRNGKey(0)
    k_x, k_p = jax.random.split(key)

    # Deterministic parameters (synthetic; shapes per Cloud.__init__ with num_class=10).
    params = make_cloud_params(k_p, NUM_CLASS)

    # Small synthetic head output: NCHW (B, 512, 1, 1) as a VGG feature extractor emits.
    x = jax.random.normal(k_x, (2, HIDDEN, 1, 1), dtype=jnp.float32)

    out = cloud_forward(x, params)
    out = jax.block_until_ready(out)

    ref = cloud_forward_ref(x, params)
    assert out.shape == (2, NUM_CLASS), out.shape
    assert jnp.allclose(out, ref, atol=1e-2, rtol=1e-2), "mismatch vs reference"

    print("KERNEL_OK")
</pallas_src>

<mosaic_0001>
module attributes {stable_mosaic.version = 11 : i64} {
  func.func @cloud_classifier_kernel(%arg0: i32, %arg1: memref<8x512xf32, #tpu.memory_space<vmem>>, %arg2: memref<512x512xbf16, #tpu.memory_space<vmem>>, %arg3: memref<1x512xf32, #tpu.memory_space<vmem>>, %arg4: memref<512x512xbf16, #tpu.memory_space<vmem>>, %arg5: memref<1x512xf32, #tpu.memory_space<vmem>>, %arg6: memref<512x128xbf16, #tpu.memory_space<vmem>>, %arg7: memref<1x128xf32, #tpu.memory_space<vmem>>, %arg8: memref<8x128xf32, #tpu.memory_space<vmem>>) attributes {dimension_semantics = [#tpu.dimension_semantics<parallel>], iteration_bounds = array<i64: 1>, scalar_prefetch = 0 : i64, scratch_operands = 0 : i64, tpu.core_type = #tpu.core_type<tc>, window_params = [{transform_indices = @transform_0, window_bounds = array<i64: 8, 512>}, {pipeline_mode = #tpu.pipeline_mode<synchronous>, transform_indices = @transform_1, window_bounds = array<i64: 512, 512>}, {pipeline_mode = #tpu.pipeline_mode<synchronous>, transform_indices = @transform_2, window_bounds = array<i64: 1, 512>}, {pipeline_mode = #tpu.pipeline_mode<synchronous>, transform_indices = @transform_3, window_bounds = array<i64: 512, 512>}, {pipeline_mode = #tpu.pipeline_mode<synchronous>, transform_indices = @transform_4, window_bounds = array<i64: 1, 512>}, {pipeline_mode = #tpu.pipeline_mode<synchronous>, transform_indices = @transform_5, window_bounds = array<i64: 512, 128>}, {pipeline_mode = #tpu.pipeline_mode<synchronous>, transform_indices = @transform_6, window_bounds = array<i64: 1, 128>}, {transform_indices = @transform_7, window_bounds = array<i64: 8, 128>}]} {
    %c0 = arith.constant 0 : index
    %c0_0 = arith.constant 0 : index
    %0 = vector.load %arg1[%c0, %c0_0] : memref<8x512xf32, #tpu.memory_space<vmem>>, vector<8x512xf32>
    %1 = arith.truncf %0 : vector<8x512xf32> to vector<8x512xbf16>
    %c0_1 = arith.constant 0 : index
    %c0_2 = arith.constant 0 : index
    %2 = vector.load %arg2[%c0_1, %c0_2] : memref<512x512xbf16, #tpu.memory_space<vmem>>, vector<512x512xbf16>
    %cst = arith.constant dense<0.000000e+00> : vector<8x512xf32>
    %3 = tpu.matmul %1, %2, %cst {dimension_numbers = #tpu.dot_dimension_numbers<[1], [0], [0], [1], [0, 0, 1, 1], [], []>} : vector<8x512xbf16>, vector<512x512xbf16>, vector<8x512xf32> -> vector<8x512xf32>
    %c0_3 = arith.constant 0 : index
    %c0_4 = arith.constant 0 : index
    %4 = vector.load %arg3[%c0_3, %c0_4] : memref<1x512xf32, #tpu.memory_space<vmem>>, vector<1x512xf32>
    %5 = vector.broadcast %4 : vector<1x512xf32> to vector<8x512xf32>
    %6 = arith.addf %3, %5 : vector<8x512xf32>
    %cst_5 = arith.constant 0.000000e+00 : f32
    %7 = vector.broadcast %cst_5 : f32 to vector<8x512xf32>
    %8 = arith.maximumf %6, %7 : vector<8x512xf32>
    %9 = arith.truncf %8 : vector<8x512xf32> to vector<8x512xbf16>
    %c0_6 = arith.constant 0 : index
    %c0_7 = arith.constant 0 : index
    %10 = vector.load %arg4[%c0_6, %c0_7] : memref<512x512xbf16, #tpu.memory_space<vmem>>, vector<512x512xbf16>
    %cst_8 = arith.constant dense<0.000000e+00> : vector<8x512xf32>
    %11 = tpu.matmul %9, %10, %cst_8 {dimension_numbers = #tpu.dot_dimension_numbers<[1], [0], [0], [1], [0, 0, 1, 1], [], []>} : vector<8x512xbf16>, vector<512x512xbf16>, vector<8x512xf32> -> vector<8x512xf32>
    %c0_9 = arith.constant 0 : index
    %c0_10 = arith.constant 0 : index
    %12 = vector.load %arg5[%c0_9, %c0_10] : memref<1x512xf32, #tpu.memory_space<vmem>>, vector<1x512xf32>
    %13 = vector.broadcast %12 : vector<1x512xf32> to vector<8x512xf32>
    %14 = arith.addf %11, %13 : vector<8x512xf32>
    %cst_11 = arith.constant 0.000000e+00 : f32
    %15 = vector.broadcast %cst_11 : f32 to vector<8x512xf32>
    %16 = arith.maximumf %14, %15 : vector<8x512xf32>
    %17 = arith.truncf %16 : vector<8x512xf32> to vector<8x512xbf16>
    %c0_12 = arith.constant 0 : index
    %c0_13 = arith.constant 0 : index
    %18 = vector.load %arg6[%c0_12, %c0_13] : memref<512x128xbf16, #tpu.memory_space<vmem>>, vector<512x128xbf16>
    %cst_14 = arith.constant dense<0.000000e+00> : vector<8x128xf32>
    %19 = tpu.matmul %17, %18, %cst_14 {dimension_numbers = #tpu.dot_dimension_numbers<[1], [0], [0], [1], [0, 0, 1, 1], [], []>} : vector<8x512xbf16>, vector<512x128xbf16>, vector<8x128xf32> -> vector<8x128xf32>
    %c0_15 = arith.constant 0 : index
    %c0_16 = arith.constant 0 : index
    %20 = vector.load %arg7[%c0_15, %c0_16] : memref<1x128xf32, #tpu.memory_space<vmem>>, vector<1x128xf32>
    %21 = vector.broadcast %20 : vector<1x128xf32> to vector<8x128xf32>
    %22 = arith.addf %19, %21 : vector<8x128xf32>
    %c0_17 = arith.constant 0 : index
    %c0_18 = arith.constant 0 : index
    %23 = vector.load %arg8[%c0_17, %c0_18] : memref<8x128xf32, #tpu.memory_space<vmem>>, vector<8x128xf32>
    tpu.vector_store %arg8[%c0_17, %c0_18], %22 {strides = array<i32>} : memref<8x128xf32, #tpu.memory_space<vmem>>, vector<8x128xf32>,
    return
  }
  func.func @transform_0(%arg0: i32) -> (i32, i32) {
    %c0_i32 = arith.constant 0 : i32
    %c0_i32_0 = arith.constant 0 : i32
    return %arg0, %c0_i32 : i32, i32
  }
  func.func @transform_1(%arg0: i32) -> (i32, i32) {
    %c0_i32 = arith.constant 0 : i32
    %c0_i32_0 = arith.constant 0 : i32
    %c0_i32_1 = arith.constant 0 : i32
    return %c0_i32, %c0_i32_0 : i32, i32
  }
  func.func @transform_2(%arg0: i32) -> (i32, i32) {
    %c0_i32 = arith.constant 0 : i32
    %c0_i32_0 = arith.constant 0 : i32
    %c0_i32_1 = arith.constant 0 : i32
    return %c0_i32, %c0_i32_0 : i32, i32
  }
  func.func @transform_3(%arg0: i32) -> (i32, i32) {
    %c0_i32 = arith.constant 0 : i32
    %c0_i32_0 = arith.constant 0 : i32
    %c0_i32_1 = arith.constant 0 : i32
    return %c0_i32, %c0_i32_0 : i32, i32
  }
  func.func @transform_4(%arg0: i32) -> (i32, i32) {
    %c0_i32 = arith.constant 0 : i32
    %c0_i32_0 = arith.constant 0 : i32
    %c0_i32_1 = arith.constant 0 : i32
    return %c0_i32, %c0_i32_0 : i32, i32
  }
  func.func @transform_5(%arg0: i32) -> (i32, i32) {
    %c0_i32 = arith.constant 0 : i32
    %c0_i32_0 = arith.constant 0 : i32
    %c0_i32_1 = arith.constant 0 : i32
    return %c0_i32, %c0_i32_0 : i32, i32
  }
  func.func @transform_6(%arg0: i32) -> (i32, i32) {
    %c0_i32 = arith.constant 0 : i32
    %c0_i32_0 = arith.constant 0 : i32
    %c0_i32_1 = arith.constant 0 : i32
    return %c0_i32, %c0_i32_0 : i32, i32
  }
  func.func @transform_7(%arg0: i32) -> (i32, i32) {
    %c0_i32 = arith.constant 0 : i32
    %c0_i32_0 = arith.constant 0 : i32
    return %arg0, %c0_i32 : i32, i32
  }
}

</mosaic_0001>

<llo_original>
// kernel: tpu_custom_call.1
$region0: #{tpu_custom_call.1}
  #allocation0 [shape = 'u32[]', space=smem, size = 0x4, offset = 0x4, fixed_abs, tag = 'smem constant byte address 0x4 - core index']
  #allocation1 [shape = 'u32[144,128]{1,0:T(1,128)}', space=vmem, size = 0x12000, scoped, tag = 'internal scratch']
  %s0 = inlined_call_operand.hbm [shape: f32[8,512], index: 0, kind: input, shape index: {}]
  %s1 = inlined_call_operand.hbm [shape: bf16[512,512], index: 1, kind: input, shape index: {}]
  %s2 = inlined_call_operand.vmem [shape: f32[1,512], index: 2, kind: input, shape index: {}]
  %s3 = inlined_call_operand.hbm [shape: bf16[512,512], index: 3, kind: input, shape index: {}]
  %s4 = inlined_call_operand.vmem [shape: f32[1,512], index: 4, kind: input, shape index: {}]
  %s5 = inlined_call_operand.hbm [shape: bf16[512,128], index: 5, kind: input, shape index: {}]
  %s6 = inlined_call_operand.vmem [shape: f32[1,128], index: 6, kind: input, shape index: {}]
  %s7 = inlined_call_operand.hbm [shape: f32[8,128], index: 7, kind: output, shape index: {}]
  %s8 = sld [smem:[#allocation0]]
  $region54: #{tpu_custom_call.1} parent=0
    _
  %s10 = ssub.s32 1, %s8
  %s11 = scalar_select 0, %s10, %s8
  $region1: #{tpu_custom_call.1} parent=0
    #allocation2 [shape = 'u8[16384]{0}', space=vmem, size = 0x4000, scoped, tag = 'input window, operand 0, single buffered']
    #allocation3 [shape = 's32[1]{0}', space=sflag, size = 0x4, scoped, tag = 'scoped memory for tpu_custom_call.1']
    #allocation4 [shape = 's32[1]{0}', space=sflag, size = 0x4, scoped, tag = 'scoped memory for tpu_custom_call.1']
    #allocation5 [shape = 'u8[524288]{0}', space=vmem, size = 0x80000, scoped, tag = 'input window, operand 1, single buffered']
    #allocation6 [shape = 's32[1]{0}', space=sflag, size = 0x4, scoped, tag = 'scoped memory for tpu_custom_call.1']
    #allocation7 [shape = 'u8[524288]{0}', space=vmem, size = 0x80000, scoped, tag = 'input window, operand 3, single buffered']
    #allocation8 [shape = 'u8[131072]{0}', space=vmem, size = 0x20000, scoped, tag = 'input window, operand 5, single buffered']
    #allocation9 [shape = 's32[1]{0}', space=sflag, size = 0x4, scoped, tag = 'scoped memory for tpu_custom_call.1']
    #allocation10 [shape = 'u8[4096]{0}', space=vmem, size = 0x1000, scoped, tag = 'output window, operand 0, single buffered']
    %12 = vsyncpa [#allocation3], 0
    %13 = vsyncpa [#allocation6], 0
    %14 = vsyncpa [#allocation9], 0
    %15 = vsyncpa [#allocation4], 0
    // Predicated region
    $region2: #{tpu_custom_call.1} parent=1 // pred_check
      _
    $region3: #{tpu_custom_call.1} parent=1 // pred_check_branch
      %17 = sbr.rel (0) target = $region5
    $region4: #{tpu_custom_call.1} parent=1 // pred_region
      %s19 = ssub.s32 512, 512
      %20 = vsyncadd [#allocation3], %s19
      %s22 = sshll.u32 [#allocation2], 4
      %s23 = int_to_ptr.vmem [resolvable:$true] %s22
      %25 = dma.hbm_to_vmem [thread:$0]  %s0, 512, %s23, [#allocation3]
    $region5: #{tpu_custom_call.1} parent=1 // pred_fallthru
      _
    // Predicated region
    $region6: #{tpu_custom_call.1} parent=1 // pred_check
      _
    $region7: #{tpu_custom_call.1} parent=1 // pred_check_branch
      %27 = sbr.rel (0) target = $region9
    $region8: #{tpu_custom_call.1} parent=1 // pred_region
      %s29 = ssub.s32 16384, 16384
      %30 = vsyncadd [#allocation6], %s29
      %s31 = sshll.u32 [#allocation5], 4
      %s32 = int_to_ptr.vmem [resolvable:$true] %s31
      %37 = dma.hbm_to_vmem [thread:$0]  %s1, 16384, %s32, [#allocation6], 256, 256, 16
    $region9: #{tpu_custom_call.1} parent=1 // pred_fallthru
      _
    // Predicated region
    $region10: #{tpu_custom_call.1} parent=1 // pred_check
      _
    $region11: #{tpu_custom_call.1} parent=1 // pred_check_branch
      %39 = sbr.rel (0) target = $region13
    $region12: #{tpu_custom_call.1} parent=1 // pred_region
      _
    $region13: #{tpu_custom_call.1} parent=1 // pred_fallthru
      _
    // Predicated region
    $region14: #{tpu_custom_call.1} parent=1 // pred_check
      _
    $region15: #{tpu_custom_call.1} parent=1 // pred_check_branch
      %41 = sbr.rel (0) target = $region17
    $region16: #{tpu_custom_call.1} parent=1 // pred_region
      %s43 = ssub.s32 16384, 16384
      %44 = vsyncadd [#allocation6], %s43
      %s45 = sshll.u32 [#allocation7], 4
      %s46 = int_to_ptr.vmem [resolvable:$true] %s45
      %51 = dma.hbm_to_vmem [thread:$0]  %s3, 16384, %s46, [#allocation6], 256, 256, 16
    $region17: #{tpu_custom_call.1} parent=1 // pred_fallthru
      _
    // Predicated region
    $region18: #{tpu_custom_call.1} parent=1 // pred_check
      _
    $region19: #{tpu_custom_call.1} parent=1 // pred_check_branch
      %53 = sbr.rel (0) target = $region21
    $region20: #{tpu_custom_call.1} parent=1 // pred_region
      _
    $region21: #{tpu_custom_call.1} parent=1 // pred_fallthru
      _
    // Predicated region
    $region22: #{tpu_custom_call.1} parent=1 // pred_check
      _
    $region23: #{tpu_custom_call.1} parent=1 // pred_check_branch
      %55 = sbr.rel (0) target = $region25
    $region24: #{tpu_custom_call.1} parent=1 // pred_region
      %s57 = ssub.s32 4096, 4096
      %58 = vsyncadd [#allocation9], %s57
      %s59 = sshll.u32 [#allocation8], 4
      %s60 = int_to_ptr.vmem [resolvable:$true] %s59
      %65 = dma.hbm_to_vmem [thread:$0]  %s5, 4096, %s60, [#allocation9], 64, 64, 4
    $region25: #{tpu_custom_call.1} parent=1 // pred_fallthru
      _
    // Predicated region
    $region26: #{tpu_custom_call.1} parent=1 // pred_check
      _
    $region27: #{tpu_custom_call.1} parent=1 // pred_check_branch
      %67 = sbr.rel (0) target = $region29
    $region28: #{tpu_custom_call.1} parent=1 // pred_region
      _
    $region29: #{tpu_custom_call.1} parent=1 // pred_fallthru
      _
    // Predicated region
    $region30: #{tpu_custom_call.1} parent=1 // pred_check
      _
    $region31: #{tpu_custom_call.1} parent=1 // pred_check_branch
      %69 = sbr.rel (0) target = $region33
    $region32: #{tpu_custom_call.1} parent=1 // pred_region
      %70 = dma.done [#allocation3], 512
    $region33: #{tpu_custom_call.1} parent=1 // pred_fallthru
      _
    // Predicated region
    $region34: #{tpu_custom_call.1} parent=1 // pred_check
      _
    $region35: #{tpu_custom_call.1} parent=1 // pred_check_branch
      %72 = sbr.rel (0) target = $region37
    $region36: #{tpu_custom_call.1} parent=1 // pred_region
      %73 = dma.done [#allocation6], 16384
    $region37: #{tpu_custom_call.1} parent=1 // pred_fallthru
      _
    // Predicated region
    $region38: #{tpu_custom_call.1} parent=1 // pred_check
      _
    $region39: #{tpu_custom_call.1} parent=1 // pred_check_branch
      %75 = sbr.rel (0) target = $region41
    $region40: #{tpu_custom_call.1} parent=1 // pred_region
      %76 = dma.done [#allocation6], 16384
    $region41: #{tpu_custom_call.1} parent=1 // pred_fallthru
      _
    // Predicated region
    $region42: #{tpu_custom_call.1} parent=1 // pred_check
      _
    $region43: #{tpu_custom_call.1} parent=1 // pred_check_branch
      %78 = sbr.rel (0) target = $region45
    $region44: #{tpu_custom_call.1} parent=1 // pred_region
      %79 = dma.done [#allocation9], 4096
    $region45: #{tpu_custom_call.1} parent=1 // pred_fallthru
      _
    %v81 = vld [vmem:[#allocation2] sm:$0xff]
    %v82 = vld [vmem:[#allocation2 + $0x8] sm:$0xff]
    %v83 = vld [vmem:[#allocation2 + $0x10] sm:$0xff]
    %v84 = vld [vmem:[#allocation2 + $0x18] sm:$0xff]
    %v85 = vpack.c.bf16 %v81, %v81
    %v86 = vpack.c.bf16 %v82, %v82
    %v87 = vpack.c.bf16 %v83, %v83
    %v88 = vpack.c.bf16 %v84, %v84
    %v89 = vld [vmem:[#allocation5] sm:$0xff]
    %v90 = vld [vmem:[#allocation5 + $0x8] sm:$0xff]
    %v91 = vld [vmem:[#allocation5 + $0x10] sm:$0xff]
    %v92 = vld [vmem:[#allocation5 + $0x18] sm:$0xff]
    %v93 = vld [vmem:[#allocation5 + $0x20] sm:$0xff]
    %v94 = vld [vmem:[#allocation5 + $0x28] sm:$0xff]
    %v95 = vld [vmem:[#allocation5 + $0x30] sm:$0xff]
    %v96 = vld [vmem:[#allocation5 + $0x38] sm:$0xff]
    %v97 = vld [vmem:[#allocation5 + $0x40] sm:$0xff]
    %v98 = vld [vmem:[#allocation5 + $0x48] sm:$0xff]
    %v99 = vld [vmem:[#allocation5 + $0x50] sm:$0xff]
    %v100 = vld [vmem:[#allocation5 + $0x58] sm:$0xff]
    %v101 = vld [vmem:[#allocation5 + $0x60] sm:$0xff]
    %v102 = vld [vmem:[#allocation5 + $0x68] sm:$0xff]
    %v103 = vld [vmem:[#allocation5 + $0x70] sm:$0xff]
    %v104 = vld [vmem:[#allocation5 + $0x78] sm:$0xff]
    %v105 = vld [vmem:[#allocation5 + $0x80] sm:$0xff]
    %v106 = vld [vmem:[#allocation5 + $0x88] sm:$0xff]
    %v107 = vld [vmem:[#allocation5 + $0x90] sm:$0xff]
    %v108 = vld [vmem:[#allocation5 + $0x98] sm:$0xff]
    %v109 = vld [vmem:[#allocation5 + $0xa0] sm:$0xff]
    %v110 = vld [vmem:[#allocation5 + $0xa8] sm:$0xff]
    %v111 = vld [vmem:[#allocation5 + $0xb0] sm:$0xff]
    %v112 = vld [vmem:[#allocation5 + $0xb8] sm:$0xff]
    %v113 = vld [vmem:[#allocation5 + $0xc0] sm:$0xff]
    %v114 = vld [vmem:[#allocation5 + $0xc8] sm:$0xff]
    %v115 = vld [vmem:[#allocation5 + $0xd0] sm:$0xff]
    %v116 = vld [vmem:[#allocation5 + $0xd8] sm:$0xff]
    %v117 = vld [vmem:[#allocation5 + $0xe0] sm:$0xff]
    %v118 = vld [vmem:[#allocation5 + $0xe8] sm:$0xff]
    %v119 = vld [vmem:[#allocation5 + $0xf0] sm:$0xff]
    %v120 = vld [vmem:[#allocation5 + $0xf8] sm:$0xff]
    %v121 = vld [vmem:[#allocation5 + $0x100] sm:$0xff]
    %v122 = vld [vmem:[#allocation5 + $0x108] sm:$0xff]
    %v123 = vld [vmem:[#allocation5 + $0x110] sm:$0xff]
    %v124 = vld [vmem:[#allocation5 + $0x118] sm:$0xff]
    %v125 = vld [vmem:[#allocation5 + $0x120] sm:$0xff]
    %v126 = vld [vmem:[#allocation5 + $0x128] sm:$0xff]
    %v127 = vld [vmem:[#allocation5 + $0x130] sm:$0xff]
    %v128 = vld [vmem:[#allocation5 + $0x138] sm:$0xff]
    %v129 = vld [vmem:[#allocation5 + $0x140] sm:$0xff]
    %v130 = vld [vmem:[#allocation5 + $0x148] sm:$0xff]
    %v131 = vld [vmem:[#allocation5 + $0x150] sm:$0xff]
    %v132 = vld [vmem:[#allocation5 + $0x158] sm:$0xff]
    %v133 = vld [vmem:[#allocation5 + $0x160] sm:$0xff]
    %v134 = vld [vmem:[#allocation5 + $0x168] sm:$0xff]
    %v135 = vld [vmem:[#allocation5 + $0x170] sm:$0xff]
    %v136 = vld [vmem:[#allocation5 + $0x178] sm:$0xff]
    %v137 = vld [vmem:[#allocation5 + $0x180] sm:$0xff]
    %v138 = vld [vmem:[#allocation5 + $0x188] sm:$0xff]
    %v139 = vld [vmem:[#allocation5 + $0x190] sm:$0xff]
    %v140 = vld [vmem:[#allocation5 + $0x198] sm:$0xff]
    %v141 = vld [vmem:[#allocation5 + $0x1a0] sm:$0xff]
    %v142 = vld [vmem:[#allocation5 + $0x1a8] sm:$0xff]
    %v143 = vld [vmem:[#allocation5 + $0x1b0] sm:$0xff]
    %v144 = vld [vmem:[#allocation5 + $0x1b8] sm:$0xff]
    %v145 = vld [vmem:[#allocation5 + $0x1c0] sm:$0xff]
    %v146 = vld [vmem:[#allocation5 + $0x1c8] sm:$0xff]
    %v147 = vld [vmem:[#allocation5 + $0x1d0] sm:$0xff]
    %v148 = vld [vmem:[#allocation5 + $0x1d8] sm:$0xff]
    %v149 = vld [vmem:[#allocation5 + $0x1e0] sm:$0xff]
    %v150 = vld [vmem:[#allocation5 + $0x1e8] sm:$0xff]
    %v151 = vld [vmem:[#allocation5 + $0x1f0] sm:$0xff]
    %v152 = vld [vmem:[#allocation5 + $0x1f8] sm:$0xff]
    %v153 = vld [vmem:[#allocation5 + $0x200] sm:$0xff]
    %v154 = vld [vmem:[#allocation5 + $0x208] sm:$0xff]
    %v155 = vld [vmem:[#allocation5 + $0x210] sm:$0xff]
    %v156 = vld [vmem:[#allocation5 + $0x218] sm:$0xff]
    %v157 = vld [vmem:[#allocation5 + $0x220] sm:$0xff]
    %v158 = vld [vmem:[#allocation5 + $0x228] sm:$0xff]
    %v159 = vld [vmem:[#allocation5 + $0x230] sm:$0xff]
    %v160 = vld [vmem:[#allocation5 + $0x238] sm:$0xff]
    %v161 = vld [vmem:[#allocation5 + $0x240] sm:$0xff]
    %v162 = vld [vmem:[#allocation5 + $0x248] sm:$0xff]
    %v163 = vld [vmem:[#allocation5 + $0x250] sm:$0xff]
    %v164 = vld [vmem:[#allocation5 + $0x258] sm:$0xff]
    %v165 = vld [vmem:[#allocation5 + $0x260] sm:$0xff]
    %v166 = vld [vmem:[#allocation5 + $0x268] sm:$0xff]
    %v167 = vld [vmem:[#allocation5 + $0x270] sm:$0xff]
    %v168 = vld [vmem:[#allocation5 + $0x278] sm:$0xff]
    %v169 = vld [vmem:[#allocation5 + $0x280] sm:$0xff]
    %v170 = vld [vmem:[#allocation5 + $0x288] sm:$0xff]
    %v171 = vld [vmem:[#allocation5 + $0x290] sm:$0xff]
    %v172 = vld [vmem:[#allocation5 + $0x298] sm:$0xff]
    %v173 = vld [vmem:[#allocation5 + $0x2a0] sm:$0xff]
    %v174 = vld [vmem:[#allocation5 + $0x2a8] sm:$0xff]
    %v175 = vld [vmem:[#allocation5 + $0x2b0] sm:$0xff]
    %v176 = vld [vmem:[#allocation5 + $0x2b8] sm:$0xff]
    %v177 = vld [vmem:[#allocation5 + $0x2c0] sm:$0xff]
    %v178 = vld [vmem:[#allocation5 + $0x2c8] sm:$0xff]
    %v179 = vld [vmem:[#allocation5 + $0x2d0] sm:$0xff]
    %v180 = vld [vmem:[#allocation5 + $0x2d8] sm:$0xff]
    %v181 = vld [vmem:[#allocation5 + $0x2e0] sm:$0xff]
    %v182 = vld [vmem:[#allocation5 + $0x2e8] sm:$0xff]
    %v183 = vld [vmem:[#allocation5 + $0x2f0] sm:$0xff]
    %v184 = vld [vmem:[#allocation5 + $0x2f8] sm:$0xff]
    %v185 = vld [vmem:[#allocation5 + $0x300] sm:$0xff]
    %v186 = vld [vmem:[#allocation5 + $0x308] sm:$0xff]
    %v187 = vld [vmem:[#allocation5 + $0x310] sm:$0xff]
    %v188 = vld [vmem:[#allocation5 + $0x318] sm:$0xff]
    %v189 = vld [vmem:[#allocation5 + $0x320] sm:$0xff]
    %v190 = vld [vmem:[#allocation5 + $0x328] sm:$0xff]
    %v191 = vld [vmem:[#allocation5 + $0x330] sm:$0xff]
    %v192 = vld [vmem:[#allocation5 + $0x338] sm:$0xff]
    %v193 = vld [vmem:[#allocation5 + $0x340] sm:$0xff]
    %v194 = vld [vmem:[#allocation5 + $0x348] sm:$0xff]
    %v195 = vld [vmem:[#allocation5 + $0x350] sm:$0xff]
    %v196 = vld [vmem:[#allocation5 + $0x358] sm:$0xff]
    %v197 = vld [vmem:[#allocation5 + $0x360] sm:$0xff]
    %v198 = vld [vmem:[#allocation5 + $0x368] sm:$0xff]
    %v199 = vld [vmem:[#allocation5 + $0x370] sm:$0xff]
    %v200 = vld [vmem:[#allocation5 + $0x378] sm:$0xff]
    %v201 = vld [vmem:[#allocation5 + $0x380] sm:$0xff]
    %v202 = vld [vmem:[#allocation5 + $0x388] sm:$0xff]
    %v203 = vld [vmem:[#allocation5 + $0x390] sm:$0xff]
    %v204 = vld [vmem:[#allocation5 + $0x398] sm:$0xff]
    %v205 = vld [vmem:[#allocation5 + $0x3a0] sm:$0xff]
    %v206 = vld [vmem:[#allocation5 + $0x3a8] sm:$0xff]
    %v207 = vld [vmem:[#allocation5 + $0x3b0] sm:$0xff]
    %v208 = vld [vmem:[#allocation5 + $0x3b8] sm:$0xff]
    %v209 = vld [vmem:[#allocation5 + $0x3c0] sm:$0xff]
    %v210 = vld [vmem:[#allocation5 + $0x3c8] sm:$0xff]
    %v211 = vld [vmem:[#allocation5 + $0x3d0] sm:$0xff]
    %v212 = vld [vmem:[#allocation5 + $0x3d8] sm:$0xff]
    %v213 = vld [vmem:[#allocation5 + $0x3e0] sm:$0xff]
    %v214 = vld [vmem:[#allocation5 + $0x3e8] sm:$0xff]
    %v215 = vld [vmem:[#allocation5 + $0x3f0] sm:$0xff]
    %v216 = vld [vmem:[#allocation5 + $0x3f8] sm:$0xff]
    %v217 = vld [vmem:[%s2] sm:$0xf]
    %v219 = vlaneseq
    %v220 = vshrl.u32 %v219, 7
    %v221 = vsub.s32 0, %v220
    %v222 = vrot.slane %v217, %v221
    %v223 = vlaneseq
    %v224 = vshrl.u32 %v223, 7
    %v225 = vsub.s32 1, %v224
    %v226 = vrot.slane %v217, %v225
    %v227 = vlaneseq
    %v228 = vshrl.u32 %v227, 7
    %v229 = vsub.s32 2, %v228
    %v230 = vrot.slane %v217, %v229
    %v231 = vlaneseq
    %v232 = vshrl.u32 %v231, 7
    %v233 = vsub.s32 3, %v232
    %v234 = vrot.slane %v217, %v233
    %v367 = vunpack.c.l.b16 %v89
    %v368 = vunpack.c.h.b16 %v89
    %v369 = vunpack.c.l.b16 %v90
    %v370 = vunpack.c.h.b16 %v90
    %v371 = vunpack.c.l.b16 %v91
    %v372 = vunpack.c.h.b16 %v91
    %v373 = vunpack.c.l.b16 %v92
    %v374 = vunpack.c.h.b16 %v92
    %v375 = vunpack.c.l.b16 %v93
    %v376 = vunpack.c.h.b16 %v93
    %v377 = vunpack.c.l.b16 %v94
    %v378 = vunpack.c.h.b16 %v94
    %v379 = vunpack.c.l.b16 %v95
    %v380 = vunpack.c.h.b16 %v95
    %v381 = vunpack.c.l.b16 %v96
    %v382 = vunpack.c.h.b16 %v96
    %v383 = vunpack.c.l.b16 %v97
    %v384 = vunpack.c.h.b16 %v97
    %v385 = vunpack.c.l.b16 %v98
    %v386 = vunpack.c.h.b16 %v98
    %v387 = vunpack.c.l.b16 %v99
    %v388 = vunpack.c.h.b16 %v99
    %v389 = vunpack.c.l.b16 %v100
    %v390 = vunpack.c.h.b16 %v100
    %v391 = vunpack.c.l.b16 %v101
    %v392 = vunpack.c.h.b16 %v101
    %v393 = vunpack.c.l.b16 %v102
    %v394 = vunpack.c.h.b16 %v102
    %v395 = vunpack.c.l.b16 %v103
    %v396 = vunpack.c.h.b16 %v103
    %v397 = vunpack.c.l.b16 %v104
    %v398 = vunpack.c.h.b16 %v104
    %v399 = vunpack.c.l.b16 %v105
    %v400 = vunpack.c.h.b16 %v105
    %v401 = vunpack.c.l.b16 %v106
    %v402 = vunpack.c.h.b16 %v106
    %v403 = vunpack.c.l.b16 %v107
    %v404 = vunpack.c.h.b16 %v107
    %v405 = vunpack.c.l.b16 %v108
    %v406 = vunpack.c.h.b16 %v108
    %v407 = vunpack.c.l.b16 %v109
    %v408 = vunpack.c.h.b16 %v109
    %v409 = vunpack.c.l.b16 %v110
    %v410 = vunpack.c.h.b16 %v110
    %v411 = vunpack.c.l.b16 %v111
    %v412 = vunpack.c.h.b16 %v111
    %v413 = vunpack.c.l.b16 %v112
    %v414 = vunpack.c.h.b16 %v112
    %v415 = vunpack.c.l.b16 %v113
    %v416 = vunpack.c.h.b16 %v113
    %v417 = vunpack.c.l.b16 %v114
    %v418 = vunpack.c.h.b16 %v114
    %v419 = vunpack.c.l.b16 %v115
    %v420 = vunpack.c.h.b16 %v115
    %v421 = vunpack.c.l.b16 %v116
    %v422 = vunpack.c.h.b16 %v116
    %v423 = vunpack.c.l.b16 %v117
    %v424 = vunpack.c.h.b16 %v117
    %v425 = vunpack.c.l.b16 %v118
    %v426 = vunpack.c.h.b16 %v118
    %v427 = vunpack.c.l.b16 %v119
    %v428 = vunpack.c.h.b16 %v119
    %v429 = vunpack.c.l.b16 %v120
    %v430 = vunpack.c.h.b16 %v120
    %v431 = vunpack.c.l.b16 %v121
    %v432 = vunpack.c.h.b16 %v121
    %v433 = vunpack.c.l.b16 %v122
    %v434 = vunpack.c.h.b16 %v122
    %v435 = vunpack.c.l.b16 %v123
    %v436 = vunpack.c.h.b16 %v123
    %v437 = vunpack.c.l.b16 %v124
    %v438 = vunpack.c.h.b16 %v124
    %v439 = vunpack.c.l.b16 %v125
    %v440 = vunpack.c.h.b16 %v125
    %v441 = vunpack.c.l.b16 %v126
    %v442 = vunpack.c.h.b16 %v126
    %v443 = vunpack.c.l.b16 %v127
    %v444 = vunpack.c.h.b16 %v127
    %v445 = vunpack.c.l.b16 %v128
    %v446 = vunpack.c.h.b16 %v128
    %v447 = vunpack.c.l.b16 %v129
    %v448 = vunpack.c.h.b16 %v129
    %v449 = vunpack.c.l.b16 %v130
    %v450 = vunpack.c.h.b16 %v130
    %v451 = vunpack.c.l.b16 %v131
    %v452 = vunpack.c.h.b16 %v131
    %v453 = vunpack.c.l.b16 %v132
    %v454 = vunpack.c.h.b16 %v132
    %v455 = vunpack.c.l.b16 %v133
    %v456 = vunpack.c.h.b16 %v133
    %v457 = vunpack.c.l.b16 %v134
    %v458 = vunpack.c.h.b16 %v134
    %v459 = vunpack.c.l.b16 %v135
    %v460 = vunpack.c.h.b16 %v135
    %v461 = vunpack.c.l.b16 %v136
    %v462 = vunpack.c.h.b16 %v136
    %v463 = vunpack.c.l.b16 %v137
    %v464 = vunpack.c.h.b16 %v137
    %v465 = vunpack.c.l.b16 %v138
    %v466 = vunpack.c.h.b16 %v138
    %v467 = vunpack.c.l.b16 %v139
    %v468 = vunpack.c.h.b16 %v139
    %v469 = vunpack.c.l.b16 %v140
    %v470 = vunpack.c.h.b16 %v140
    %v471 = vunpack.c.l.b16 %v141
    %v472 = vunpack.c.h.b16 %v141
    %v473 = vunpack.c.l.b16 %v142
    %v474 = vunpack.c.h.b16 %v142
    %v475 = vunpack.c.l.b16 %v143
    %v476 = vunpack.c.h.b16 %v143
    %v477 = vunpack.c.l.b16 %v144
    %v478 = vunpack.c.h.b16 %v144
    %v479 = vunpack.c.l.b16 %v145
    %v480 = vunpack.c.h.b16 %v145
    %v481 = vunpack.c.l.b16 %v146
    %v482 = vunpack.c.h.b16 %v146
    %v483 = vunpack.c.l.b16 %v147
    %v484 = vunpack.c.h.b16 %v147
    %v485 = vunpack.c.l.b16 %v148
    %v486 = vunpack.c.h.b16 %v148
    %v487 = vunpack.c.l.b16 %v149
    %v488 = vunpack.c.h.b16 %v149
    %v489 = vunpack.c.l.b16 %v150
    %v490 = vunpack.c.h.b16 %v150
    %v491 = vunpack.c.l.b16 %v151
    %v492 = vunpack.c.h.b16 %v151
    %v493 = vunpack.c.l.b16 %v152
    %v494 = vunpack.c.h.b16 %v152
    %v495 = vunpack.c.l.b16 %v153
    %v496 = vunpack.c.h.b16 %v153
    %v497 = vunpack.c.l.b16 %v154
    %v498 = vunpack.c.h.b16 %v154
    %v499 = vunpack.c.l.b16 %v155
    %v500 = vunpack.c.h.b16 %v155
    %v501 = vunpack.c.l.b16 %v156
    %v502 = vunpack.c.h.b16 %v156
    %v503 = vunpack.c.l.b16 %v157
    %v504 = vunpack.c.h.b16 %v157
    %v505 = vunpack.c.l.b16 %v158
    %v506 = vunpack.c.h.b16 %v158
    %v507 = vunpack.c.l.b16 %v159
    %v508 = vunpack.c.h.b16 %v159
    %v509 = vunpack.c.l.b16 %v160
    %v510 = vunpack.c.h.b16 %v160
    %v511 = vunpack.c.l.b16 %v161
    %v512 = vunpack.c.h.b16 %v161
    %v513 = vunpack.c.l.b16 %v162
    %v514 = vunpack.c.h.b16 %v162
    %v515 = vunpack.c.l.b16 %v163
    %v516 = vunpack.c.h.b16 %v163
    %v517 = vunpack.c.l.b16 %v164
    %v518 = vunpack.c.h.b16 %v164
    %v519 = vunpack.c.l.b16 %v165
    %v520 = vunpack.c.h.b16 %v165
    %v521 = vunpack.c.l.b16 %v166
    %v522 = vunpack.c.h.b16 %v166
    %v523 = vunpack.c.l.b16 %v167
    %v524 = vunpack.c.h.b16 %v167
    %v525 = vunpack.c.l.b16 %v168
    %v526 = vunpack.c.h.b16 %v168
    %v527 = vunpack.c.l.b16 %v169
    %v528 = vunpack.c.h.b16 %v169
    %v529 = vunpack.c.l.b16 %v170
    %v530 = vunpack.c.h.b16 %v170
    %v531 = vunpack.c.l.b16 %v171
    %v532 = vunpack.c.h.b16 %v171
    %v533 = vunpack.c.l.b16 %v172
    %v534 = vunpack.c.h.b16 %v172
    %v535 = vunpack.c.l.b16 %v173
    %v536 = vunpack.c.h.b16 %v173
    %v537 = vunpack.c.l.b16 %v174
    %v538 = vunpack.c.h.b16 %v174
    %v539 = vunpack.c.l.b16 %v175
    %v540 = vunpack.c.h.b16 %v175
    %v541 = vunpack.c.l.b16 %v176
    %v542 = vunpack.c.h.b16 %v176
    %v543 = vunpack.c.l.b16 %v177
    %v544 = vunpack.c.h.b16 %v177
    %v545 = vunpack.c.l.b16 %v178
    %v546 = vunpack.c.h.b16 %v178
    %v547 = vunpack.c.l.b16 %v179
    %v548 = vunpack.c.h.b16 %v179
    %v549 = vunpack.c.l.b16 %v180
    %v550 = vunpack.c.h.b16 %v180
    %v551 = vunpack.c.l.b16 %v181
    %v552 = vunpack.c.h.b16 %v181
    %v553 = vunpack.c.l.b16 %v182
    %v554 = vunpack.c.h.b16 %v182
    %v555 = vunpack.c.l.b16 %v183
    %v556 = vunpack.c.h.b16 %v183
    %v557 = vunpack.c.l.b16 %v184
    %v558 = vunpack.c.h.b16 %v184
    %v559 = vunpack.c.l.b16 %v185
    %v560 = vunpack.c.h.b16 %v185
    %v561 = vunpack.c.l.b16 %v186
    %v562 = vunpack.c.h.b16 %v186
    %v563 = vunpack.c.l.b16 %v187
    %v564 = vunpack.c.h.b16 %v187
    %v565 = vunpack.c.l.b16 %v188
    %v566 = vunpack.c.h.b16 %v188
    %v567 = vunpack.c.l.b16 %v189
    %v568 = vunpack.c.h.b16 %v189
    %v569 = vunpack.c.l.b16 %v190
    %v570 = vunpack.c.h.b16 %v190
    %v571 = vunpack.c.l.b16 %v191
    %v572 = vunpack.c.h.b16 %v191
    %v573 = vunpack.c.l.b16 %v192
    %v574 = vunpack.c.h.b16 %v192
    %v575 = vunpack.c.l.b16 %v193
    %v576 = vunpack.c.h.b16 %v193
    %v577 = vunpack.c.l.b16 %v194
    %v578 = vunpack.c.h.b16 %v194
    %v579 = vunpack.c.l.b16 %v195
    %v580 = vunpack.c.h.b16 %v195
    %v581 = vunpack.c.l.b16 %v196
    %v582 = vunpack.c.h.b16 %v196
    %v583 = vunpack.c.l.b16 %v197
    %v584 = vunpack.c.h.b16 %v197
    %v585 = vunpack.c.l.b16 %v198
    %v586 = vunpack.c.h.b16 %v198
    %v587 = vunpack.c.l.b16 %v199
    %v588 = vunpack.c.h.b16 %v199
    %v589 = vunpack.c.l.b16 %v200
    %v590 = vunpack.c.h.b16 %v200
    %v591 = vunpack.c.l.b16 %v201
    %v592 = vunpack.c.h.b16 %v201
    %v593 = vunpack.c.l.b16 %v202
    %v594 = vunpack.c.h.b16 %v202
    %v595 = vunpack.c.l.b16 %v203
    %v596 = vunpack.c.h.b16 %v203
    %v597 = vunpack.c.l.b16 %v204
    %v598 = vunpack.c.h.b16 %v204
    %v599 = vunpack.c.l.b16 %v205
    %v600 = vunpack.c.h.b16 %v205
    %v601 = vunpack.c.l.b16 %v206
    %v602 = vunpack.c.h.b16 %v206
    %v603 = vunpack.c.l.b16 %v207
    %v604 = vunpack.c.h.b16 %v207
    %v605 = vunpack.c.l.b16 %v208
    %v606 = vunpack.c.h.b16 %v208
    %v607 = vunpack.c.l.b16 %v209
    %v608 = vunpack.c.h.b16 %v209
    %v609 = vunpack.c.l.b16 %v210
    %v610 = vunpack.c.h.b16 %v210
    %v611 = vunpack.c.l.b16 %v211
    %v612 = vunpack.c.h.b16 %v211
    %v613 = vunpack.c.l.b16 %v212
    %v614 = vunpack.c.h.b16 %v212
    %v615 = vunpack.c.l.b16 %v213
    %v616 = vunpack.c.h.b16 %v213
    %v617 = vunpack.c.l.b16 %v214
    %v618 = vunpack.c.h.b16 %v214
    %v619 = vunpack.c.l.b16 %v215
    %v620 = vunpack.c.h.b16 %v215
    %v621 = vunpack.c.l.b16 %v216
    %v622 = vunpack.c.h.b16 %v216
    %v623 = vpack.c.b16 %v371, %v367
    %v624 = vpack.c.b16 %v372, %v368
    %v625 = vpack.c.b16 %v373, %v369
    %v626 = vpack.c.b16 %v374, %v370
    %v627 = vpack.c.b16 %v379, %v375
    %v628 = vpack.c.b16 %v380, %v376
    %v629 = vpack.c.b16 %v381, %v377
    %v630 = vpack.c.b16 %v382, %v378
    %v631 = vpack.c.b16 %v387, %v383
    %v632 = vpack.c.b16 %v388, %v384
    %v633 = vpack.c.b16 %v389, %v385
    %v634 = vpack.c.b16 %v390, %v386
    %v635 = vpack.c.b16 %v395, %v391
    %v636 = vpack.c.b16 %v396, %v392
    %v637 = vpack.c.b16 %v397, %v393
    %v638 = vpack.c.b16 %v398, %v394
    %v639 = vpack.c.b16 %v403, %v399
    %v640 = vpack.c.b16 %v404, %v400
    %v641 = vpack.c.b16 %v405, %v401
    %v642 = vpack.c.b16 %v406, %v402
    %v643 = vpack.c.b16 %v411, %v407
    %v644 = vpack.c.b16 %v412, %v408
    %v645 = vpack.c.b16 %v413, %v409
    %v646 = vpack.c.b16 %v414, %v410
    %v647 = vpack.c.b16 %v419, %v415
    %v648 = vpack.c.b16 %v420, %v416
    %v649 = vpack.c.b16 %v421, %v417
    %v650 = vpack.c.b16 %v422, %v418
    %v651 = vpack.c.b16 %v427, %v423
    %v652 = vpack.c.b16 %v428, %v424
    %v653 = vpack.c.b16 %v429, %v425
    %v654 = vpack.c.b16 %v430, %v426
    %v655 = vpack.c.b16 %v435, %v431
    %v656 = vpack.c.b16 %v436, %v432
    %v657 = vpack.c.b16 %v437, %v433
    %v658 = vpack.c.b16 %v438, %v434
    %v659 = vpack.c.b16 %v443, %v439
    %v660 = vpack.c.b16 %v444, %v440
    %v661 = vpack.c.b16 %v445, %v441
    %v662 = vpack.c.b16 %v446, %v442
    %v663 = vpack.c.b16 %v451, %v447
    %v664 = vpack.c.b16 %v452, %v448
    %v665 = vpack.c.b16 %v453, %v449
    %v666 = vpack.c.b16 %v454, %v450
    %v667 = vpack.c.b16 %v459, %v455
    %v668 = vpack.c.b16 %v460, %v456
    %v669 = vpack.c.b16 %v461, %v457
    %v670 = vpack.c.b16 %v462, %v458
    %v671 = vpack.c.b16 %v467, %v463
    %v672 = vpack.c.b16 %v468, %v464
    %v673 = vpack.c.b16 %v469, %v465
    %v674 = vpack.c.b16 %v470, %v466
    %v675 = vpack.c.b16 %v475, %v471
    %v676 = vpack.c.b16 %v476, %v472
    %v677 = vpack.c.b16 %v477, %v473
    %v678 = vpack.c.b16 %v478, %v474
    %v679 = vpack.c.b16 %v483, %v479
    %v680 = vpack.c.b16 %v484, %v480
    %v681 = vpack.c.b16 %v485, %v481
    %v682 = vpack.c.b16 %v486, %v482
    %v683 = vpack.c.b16 %v491, %v487
    %v684 = vpack.c.b16 %v492, %v488
    %v685 = vpack.c.b16 %v493, %v489
    %v686 = vpack.c.b16 %v494, %v490
    %v687 = vpack.c.b16 %v499, %v495
    %v688 = vpack.c.b16 %v500, %v496
    %v689 = vpack.c.b16 %v501, %v497
    %v690 = vpack.c.b16 %v502, %v498
    %v691 = vpack.c.b16 %v507, %v503
    %v692 = vpack.c.b16 %v508, %v504
    %v693 = vpack.c.b16 %v509, %v505
    %v694 = vpack.c.b16 %v510, %v506
    %v695 = vpack.c.b16 %v515, %v511
    %v696 = vpack.c.b16 %v516, %v512
    %v697 = vpack.c.b16 %v517, %v513
    %v698 = vpack.c.b16 %v518, %v514
    %v699 = vpack.c.b16 %v523, %v519
    %v700 = vpack.c.b16 %v524, %v520
    %v701 = vpack.c.b16 %v525, %v521
    %v702 = vpack.c.b16 %v526, %v522
    %v703 = vpack.c.b16 %v531, %v527
    %v704 = vpack.c.b16 %v532, %v528
    %v705 = vpack.c.b16 %v533, %v529
    %v706 = vpack.c.b16 %v534, %v530
    %v707 = vpack.c.b16 %v539, %v535
    %v708 = vpack.c.b16 %v540, %v536
    %v709 = vpack.c.b16 %v541, %v537
    %v710 = vpack.c.b16 %v542, %v538
    %v711 = vpack.c.b16 %v547, %v543
    %v712 = vpack.c.b16 %v548, %v544
    %v713 = vpack.c.b16 %v549, %v545
    %v714 = vpack.c.b16 %v550, %v546
    %v715 = vpack.c.b16 %v555, %v551
    %v716 = vpack.c.b16 %v556, %v552
    %v717 = vpack.c.b16 %v557, %v553
    %v718 = vpack.c.b16 %v558, %v554
    %v719 = vpack.c.b16 %v563, %v559
    %v720 = vpack.c.b16 %v564, %v560
    %v721 = vpack.c.b16 %v565, %v561
    %v722 = vpack.c.b16 %v566, %v562
    %v723 = vpack.c.b16 %v571, %v567
    %v724 = vpack.c.b16 %v572, %v568
    %v725 = vpack.c.b16 %v573, %v569
    %v726 = vpack.c.b16 %v574, %v570
    %v727 = vpack.c.b16 %v579, %v575
    %v728 = vpack.c.b16 %v580, %v576
    %v729 = vpack.c.b16 %v581, %v577
    %v730 = vpack.c.b16 %v582, %v578
    %v731 = vpack.c.b16 %v587, %v583
    %v732 = vpack.c.b16 %v588, %v584
    %v733 = vpack.c.b16 %v589, %v585
    %v734 = vpack.c.b16 %v590, %v586
    %v735 = vpack.c.b16 %v595, %v591
    %v736 = vpack.c.b16 %v596, %v592
    %v737 = vpack.c.b16 %v597, %v593
    %v738 = vpack.c.b16 %v598, %v594
    %v739 = vpack.c.b16 %v603, %v599
    %v740 = vpack.c.b16 %v604, %v600
    %v741 = vpack.c.b16 %v605, %v601
    %v742 = vpack.c.b16 %v606, %v602
    %v743 = vpack.c.b16 %v611, %v607
    %v744 = vpack.c.b16 %v612, %v608
    %v745 = vpack.c.b16 %v613, %v609
    %v746 = vpack.c.b16 %v614, %v610
    %v747 = vpack.c.b16 %v619, %v615
    %v748 = vpack.c.b16 %v620, %v616
    %v749 = vpack.c.b16 %v621, %v617
    %v750 = vpack.c.b16 %v622, %v618
    %879 = vmatprep.subr.bf16.mxu0 %v624
    %880 = vmatpush1.bf16.msra.mxu0 %v623
    %881 = vmatprep.subr.bf16.mxu0 %v628
    %882 = vmatpush1.bf16.msra.mxu0 %v627
    %883 = vmatprep.subr.bf16.mxu0 %v632
    %884 = vmatpush1.bf16.msra.mxu0 %v631
    %885 = vmatprep.subr.bf16.mxu0 %v636
    %886 = vmatpush1.bf16.msra.mxu0 %v635
    %887 = vmatprep.subr.bf16.mxu0 %v640
    %888 = vmatpush1.bf16.msra.mxu0 %v639
    %889 = vmatprep.subr.bf16.mxu0 %v644
    %890 = vmatpush1.bf16.msra.mxu0 %v643
    %891 = vmatprep.subr.bf16.mxu0 %v648
    %892 = vmatpush1.bf16.msra.mxu0 %v647
    %893 = vmatprep.subr.bf16.mxu0 %v652
    %894 = vmatpush1.bf16.msra.mxu0 %v651
    %895 = vmatprep.subr.bf16.mxu0 %v656
    %896 = vmatpush1.bf16.msra.mxu0 %v655
    %897 = vmatprep.subr.bf16.mxu0 %v660
    %898 = vmatpush1.bf16.msra.mxu0 %v659
    %899 = vmatprep.subr.bf16.mxu0 %v664
    %900 = vmatpush1.bf16.msra.mxu0 %v663
    %901 = vmatprep.subr.bf16.mxu0 %v668
    %902 = vmatpush1.bf16.msra.mxu0 %v667
    %903 = vmatprep.subr.bf16.mxu0 %v672
    %904 = vmatpush1.bf16.msra.mxu0 %v671
    %905 = vmatprep.subr.bf16.mxu0 %v676
    %906 = vmatpush1.bf16.msra.mxu0 %v675
    %907 = vmatprep.subr.bf16.mxu0 %v680
    %908 = vmatpush1.bf16.msra.mxu0 %v679
    %909 = vmatprep.subr.bf16.mxu0 %v684
    %910 = vmatpush1.bf16.msra.mxu0 %v683
    %911 = vmatprep.mubr.bf16.mxu0 %v86
    %912 = vmatmul.mubr.bf16.gmra.mrb[0].mxu0 %v85
    %v913 = vpop.f32.mrb[0].mxu0
    %v914 = vadd.f32 %v222, %v913
    %v915 = vpop.f32.mrb[0].mxu0
    %v916 = vadd.f32 %v226, %v915
    %v917 = vpop.f32.mrb[0].mxu0
    %v918 = vpop.f32.mrb[0].mxu0
    %919 = vdwg.mxu0
    %920 = vmatprep.subr.bf16.mxu0 %v688
    %921 = vmatpush1.bf16.msra.mxu0 %v687
    %922 = vmatprep.subr.bf16.mxu0 %v692
    %923 = vmatpush1.bf16.msra.mxu0 %v691
    %924 = vmatprep.subr.bf16.mxu0 %v696
    %925 = vmatpush1.bf16.msra.mxu0 %v695
    %926 = vmatprep.subr.bf16.mxu0 %v700
    %927 = vmatpush1.bf16.msra.mxu0 %v699
    %928 = vmatprep.subr.bf16.mxu0 %v704
    %929 = vmatpush1.bf16.msra.mxu0 %v703
    %930 = vmatprep.subr.bf16.mxu0 %v708
    %931 = vmatpush1.bf16.msra.mxu0 %v707
    %932 = vmatprep.subr.bf16.mxu0 %v712
    %933 = vmatpush1.bf16.msra.mxu0 %v711
    %934 = vmatprep.subr.bf16.mxu0 %v716
    %935 = vmatpush1.bf16.msra.mxu0 %v715
    %936 = vmatprep.subr.bf16.mxu0 %v720
    %937 = vmatpush1.bf16.msra.mxu0 %v719
    %938 = vmatprep.subr.bf16.mxu0 %v724
    %939 = vmatpush1.bf16.msra.mxu0 %v723
    %940 = vmatprep.subr.bf16.mxu0 %v728
    %941 = vmatpush1.bf16.msra.mxu0 %v727
    %942 = vmatprep.subr.bf16.mxu0 %v732
    %943 = vmatpush1.bf16.msra.mxu0 %v731
    %944 = vmatprep.subr.bf16.mxu0 %v736
    %945 = vmatpush1.bf16.msra.mxu0 %v735
    %946 = vmatprep.subr.bf16.mxu0 %v740
    %947 = vmatpush1.bf16.msra.mxu0 %v739
    %948 = vmatprep.subr.bf16.mxu0 %v744
    %949 = vmatpush1.bf16.msra.mxu0 %v743
    %950 = vmatprep.subr.bf16.mxu0 %v748
    %951 = vmatpush1.bf16.msra.mxu0 %v747
    %952 = vmatprep.mubr.bf16.mxu0 %v88
    %953 = vmatmul.mubr.bf16.gmra.mrb[0].mxu0 %v87
    %v954 = vpop.f32.mrb[0].mxu0
    %v955 = vadd.f32 %v914, %v954
    %v956 = vpop.f32.mrb[0].mxu0
    %v957 = vadd.f32 %v916, %v956
    %v958 = vpop.f32.mrb[0].mxu0
    %v959 = vpop.f32.mrb[0].mxu0
    %960 = vdwg.mxu0
    %961 = vmatprep.subr.bf16.mxu0 %v626
    %962 = vmatpush1.bf16.msra.mxu0 %v625
    %963 = vmatprep.subr.bf16.mxu0 %v630
    %964 = vmatpush1.bf16.msra.mxu0 %v629
    %965 = vmatprep.subr.bf16.mxu0 %v634
    %966 = vmatpush1.bf16.msra.mxu0 %v633
    %967 = vmatprep.subr.bf16.mxu0 %v638
    %968 = vmatpush1.bf16.msra.mxu0 %v637
    %969 = vmatprep.subr.bf16.mxu0 %v642
    %970 = vmatpush1.bf16.msra.mxu0 %v641
    %971 = vmatprep.subr.bf16.mxu0 %v646
    %972 = vmatpush1.bf16.msra.mxu0 %v645
    %973 = vmatprep.subr.bf16.mxu0 %v650
    %974 = vmatpush1.bf16.msra.mxu0 %v649
    %975 = vmatprep.subr.bf16.mxu0 %v654
    %976 = vmatpush1.bf16.msra.mxu0 %v653
    %977 = vmatprep.subr.bf16.mxu0 %v658
    %978 = vmatpush1.bf16.msra.mxu0 %v657
    %979 = vmatprep.subr.bf16.mxu0 %v662
    %980 = vmatpush1.bf16.msra.mxu0 %v661
    %981 = vmatprep.subr.bf16.mxu0 %v666
    %982 = vmatpush1.bf16.msra.mxu0 %v665
    %983 = vmatprep.subr.bf16.mxu0 %v670
    %984 = vmatpush1.bf16.msra.mxu0 %v669
    %985 = vmatprep.subr.bf16.mxu0 %v674
    %986 = vmatpush1.bf16.msra.mxu0 %v673
    %987 = vmatprep.subr.bf16.mxu0 %v678
    %988 = vmatpush1.bf16.msra.mxu0 %v677
    %989 = vmatprep.subr.bf16.mxu0 %v682
    %990 = vmatpush1.bf16.msra.mxu0 %v681
    %991 = vmatprep.subr.bf16.mxu0 %v686
    %992 = vmatpush1.bf16.msra.mxu0 %v685
    %993 = vmatprep.mubr.bf16.mxu0 %v86
    %994 = vmatmul.mubr.bf16.gmra.mrb[0].mxu0 %v85
    %v995 = vpop.f32.mrb[0].mxu0
    %v996 = vadd.f32 %v230, %v995
    %v997 = vpop.f32.mrb[0].mxu0
    %v998 = vadd.f32 %v234, %v997
    %v999 = vpop.f32.mrb[0].mxu0
    %v1000 = vpop.f32.mrb[0].mxu0
    %1001 = vdwg.mxu0
    %1002 = vmatprep.subr.bf16.mxu0 %v690
    %1003 = vmatpush1.bf16.msra.mxu0 %v689
    %1004 = vmatprep.subr.bf16.mxu0 %v694
    %1005 = vmatpush1.bf16.msra.mxu0 %v693
    %1006 = vmatprep.subr.bf16.mxu0 %v698
    %1007 = vmatpush1.bf16.msra.mxu0 %v697
    %1008 = vmatprep.subr.bf16.mxu0 %v702
    %1009 = vmatpush1.bf16.msra.mxu0 %v701
    %1010 = vmatprep.subr.bf16.mxu0 %v706
    %1011 = vmatpush1.bf16.msra.mxu0 %v705
    %1012 = vmatprep.subr.bf16.mxu0 %v710
    %1013 = vmatpush1.bf16.msra.mxu0 %v709
    %1014 = vmatprep.subr.bf16.mxu0 %v714
    %1015 = vmatpush1.bf16.msra.mxu0 %v713
    %1016 = vmatprep.subr.bf16.mxu0 %v718
    %1017 = vmatpush1.bf16.msra.mxu0 %v717
    %1018 = vmatprep.subr.bf16.mxu0 %v722
    %1019 = vmatpush1.bf16.msra.mxu0 %v721
    %1020 = vmatprep.subr.bf16.mxu0 %v726
    %1021 = vmatpush1.bf16.msra.mxu0 %v725
    %1022 = vmatprep.subr.bf16.mxu0 %v730
    %1023 = vmatpush1.bf16.msra.mxu0 %v729
    %1024 = vmatprep.subr.bf16.mxu0 %v734
    %1025 = vmatpush1.bf16.msra.mxu0 %v733
    %1026 = vmatprep.subr.bf16.mxu0 %v738
    %1027 = vmatpush1.bf16.msra.mxu0 %v737
    %1028 = vmatprep.subr.bf16.mxu0 %v742
    %1029 = vmatpush1.bf16.msra.mxu0 %v741
    %1030 = vmatprep.subr.bf16.mxu0 %v746
    %1031 = vmatpush1.bf16.msra.mxu0 %v745
    %1032 = vmatprep.subr.bf16.mxu0 %v750
    %1033 = vmatpush1.bf16.msra.mxu0 %v749
    %1034 = vmatprep.mubr.bf16.mxu0 %v88
    %1035 = vmatmul.mubr.bf16.gmra.mrb[0].mxu0 %v87
    %v1036 = vpop.f32.mrb[0].mxu0
    %v1037 = vadd.f32 %v996, %v1036
    %v1038 = vpop.f32.mrb[0].mxu0
    %v1039 = vadd.f32 %v998, %v1038
    %v1040 = vpop.f32.mrb[0].mxu0
    %v1041 = vpop.f32.mrb[0].mxu0
    %1042 = vdwg.mxu0
    %v1043 = vmax.f32 %v955, 0.0
    %v1044 = vmax.f32 %v957, 0.0
    %v1045 = vmax.f32 %v1037, 0.0
    %v1046 = vmax.f32 %v1039, 0.0
    %v1047 = vpack.c.bf16 %v1043, %v1043
    %v1048 = vpack.c.bf16 %v1044, %v1044
    %v1049 = vpack.c.bf16 %v1045, %v1045
    %v1050 = vpack.c.bf16 %v1046, %v1046
    %v1051 = vld [vmem:[#allocation7] sm:$0xff]
    %v1052 = vld [vmem:[#allocation7 + $0x8] sm:$0xff]
    %v1053 = vld [vmem:[#allocation7 + $0x10] sm:$0xff]
    %v1054 = vld [vmem:[#allocation7 + $0x18] sm:$0xff]
    %v1055 = vld [vmem:[#allocation7 + $0x20] sm:$0xff]
    %v1056 = vld [vmem:[#allocation7 + $0x28] sm:$0xff]
    %v1057 = vld [vmem:[#allocation7 + $0x30] sm:$0xff]
    %v1058 = vld [vmem:[#allocation7 + $0x38] sm:$0xff]
    %v1059 = vld [vmem:[#allocation7 + $0x40] sm:$0xff]
    %v1060 = vld [vmem:[#allocation7 + $0x48] sm:$0xff]
    %v1061 = vld [vmem:[#allocation7 + $0x50] sm:$0xff]
    %v1062 = vld [vmem:[#allocation7 + $0x58] sm:$0xff]
    %v1063 = vld [vmem:[#allocation7 + $0x60] sm:$0xff]
    %v1064 = vld [vmem:[#allocation7 + $0x68] sm:$0xff]
    %v1065 = vld [vmem:[#allocation7 + $0x70] sm:$0xff]
    %v1066 = vld [vmem:[#allocation7 + $0x78] sm:$0xff]
    %v1067 = vld [vmem:[#allocation7 + $0x80] sm:$0xff]
    %v1068 = vld [vmem:[#allocation7 + $0x88] sm:$0xff]
    %v1069 = vld [vmem:[#allocation7 + $0x90] sm:$0xff]
    %v1070 = vld [vmem:[#allocation7 + $0x98] sm:$0xff]
    %v1071 = vld [vmem:[#allocation7 + $0xa0] sm:$0xff]
    %v1072 = vld [vmem:[#allocation7 + $0xa8] sm:$0xff]
    %v1073 = vld [vmem:[#allocation7 + $0xb0] sm:$0xff]
    %v1074 = vld [vmem:[#allocation7 + $0xb8] sm:$0xff]
    %v1075 = vld [vmem:[#allocation7 + $0xc0] sm:$0xff]
    %v1076 = vld [vmem:[#allocation7 + $0xc8] sm:$0xff]
    %v1077 = vld [vmem:[#allocation7 + $0xd0] sm:$0xff]
    %v1078 = vld [vmem:[#allocation7 + $0xd8] sm:$0xff]
    %v1079 = vld [vmem:[#allocation7 + $0xe0] sm:$0xff]
    %v1080 = vld [vmem:[#allocation7 + $0xe8] sm:$0xff]
    %v1081 = vld [vmem:[#allocation7 + $0xf0] sm:$0xff]
    %v1082 = vld [vmem:[#allocation7 + $0xf8] sm:$0xff]
    %v1083 = vld [vmem:[#allocation7 + $0x100] sm:$0xff]
    %v1084 = vld [vmem:[#allocation7 + $0x108] sm:$0xff]
    %v1085 = vld [vmem:[#allocation7 + $0x110] sm:$0xff]
    %v1086 = vld [vmem:[#allocation7 + $0x118] sm:$0xff]
    %v1087 = vld [vmem:[#allocation7 + $0x120] sm:$0xff]
    %v1088 = vld [vmem:[#allocation7 + $0x128] sm:$0xff]
    %v1089 = vld [vmem:[#allocation7 + $0x130] sm:$0xff]
    %v1090 = vld [vmem:[#allocation7 + $0x138] sm:$0xff]
    %v1091 = vld [vmem:[#allocation7 + $0x140] sm:$0xff]
    %v1092 = vld [vmem:[#allocation7 + $0x148] sm:$0xff]
    %v1093 = vld [vmem:[#allocation7 + $0x150] sm:$0xff]
    %v1094 = vld [vmem:[#allocation7 + $0x158] sm:$0xff]
    %v1095 = vld [vmem:[#allocation7 + $0x160] sm:$0xff]
    %v1096 = vld [vmem:[#allocation7 + $0x168] sm:$0xff]
    %v1097 = vld [vmem:[#allocation7 + $0x170] sm:$0xff]
    %v1098 = vld [vmem:[#allocation7 + $0x178] sm:$0xff]
    %v1099 = vld [vmem:[#allocation7 + $0x180] sm:$0xff]
    %v1100 = vld [vmem:[#allocation7 + $0x188] sm:$0xff]
    %v1101 = vld [vmem:[#allocation7 + $0x190] sm:$0xff]
    %v1102 = vld [vmem:[#allocation7 + $0x198] sm:$0xff]
    %v1103 = vld [vmem:[#allocation7 + $0x1a0] sm:$0xff]
    %v1104 = vld [vmem:[#allocation7 + $0x1a8] sm:$0xff]
    %v1105 = vld [vmem:[#allocation7 + $0x1b0] sm:$0xff]
    %v1106 = vld [vmem:[#allocation7 + $0x1b8] sm:$0xff]
    %v1107 = vld [vmem:[#allocation7 + $0x1c0] sm:$0xff]
    %v1108 = vld [vmem:[#allocation7 + $0x1c8] sm:$0xff]
    %v1109 = vld [vmem:[#allocation7 + $0x1d0] sm:$0xff]
    %v1110 = vld [vmem:[#allocation7 + $0x1d8] sm:$0xff]
    %v1111 = vld [vmem:[#allocation7 + $0x1e0] sm:$0xff]
    %v1112 = vld [vmem:[#allocation7 + $0x1e8] sm:$0xff]
    %v1113 = vld [vmem:[#allocation7 + $0x1f0] sm:$0xff]
    %v1114 = vld [vmem:[#allocation7 + $0x1f8] sm:$0xff]
    %v1115 = vld [vmem:[#allocation7 + $0x200] sm:$0xff]
    %v1116 = vld [vmem:[#allocation7 + $0x208] sm:$0xff]
    %v1117 = vld [vmem:[#allocation7 + $0x210] sm:$0xff]
    %v1118 = vld [vmem:[#allocation7 + $0x218] sm:$0xff]
    %v1119 = vld [vmem:[#allocation7 + $0x220] sm:$0xff]
    %v1120 = vld [vmem:[#allocation7 + $0x228] sm:$0xff]
    %v1121 = vld [vmem:[#allocation7 + $0x230] sm:$0xff]
    %v1122 = vld [vmem:[#allocation7 + $0x238] sm:$0xff]
    %v1123 = vld [vmem:[#allocation7 + $0x240] sm:$0xff]
    %v1124 = vld [vmem:[#allocation7 + $0x248] sm:$0xff]
    %v1125 = vld [vmem:[#allocation7 + $0x250] sm:$0xff]
    %v1126 = vld [vmem:[#allocation7 + $0x258] sm:$0xff]
    %v1127 = vld [vmem:[#allocation7 + $0x260] sm:$0xff]
    %v1128 = vld [vmem:[#allocation7 + $0x268] sm:$0xff]
    %v1129 = vld [vmem:[#allocation7 + $0x270] sm:$0xff]
    %v1130 = vld [vmem:[#allocation7 + $0x278] sm:$0xff]
    %v1131 = vld [vmem:[#allocation7 + $0x280] sm:$0xff]
    %v1132 = vld [vmem:[#allocation7 + $0x288] sm:$0xff]
    %v1133 = vld [vmem:[#allocation7 + $0x290] sm:$0xff]
    %v1134 = vld [vmem:[#allocation7 + $0x298] sm:$0xff]
    %v1135 = vld [vmem:[#allocation7 + $0x2a0] sm:$0xff]
    %v1136 = vld [vmem:[#allocation7 + $0x2a8] sm:$0xff]
    %v1137 = vld [vmem:[#allocation7 + $0x2b0] sm:$0xff]
    %v1138 = vld [vmem:[#allocation7 + $0x2b8] sm:$0xff]
    %v1139 = vld [vmem:[#allocation7 + $0x2c0] sm:$0xff]
    %v1140 = vld [vmem:[#allocation7 + $0x2c8] sm:$0xff]
    %v1141 = vld [vmem:[#allocation7 + $0x2d0] sm:$0xff]
    %v1142 = vld [vmem:[#allocation7 + $0x2d8] sm:$0xff]
    %v1143 = vld [vmem:[#allocation7 + $0x2e0] sm:$0xff]
    %v1144 = vld [vmem:[#allocation7 + $0x2e8] sm:$0xff]
    %v1145 = vld [vmem:[#allocation7 + $0x2f0] sm:$0xff]
    %v1146 = vld [vmem:[#allocation7 + $0x2f8] sm:$0xff]
    %v1147 = vld [vmem:[#allocation7 + $0x300] sm:$0xff]
    %v1148 = vld [vmem:[#allocation7 + $0x308] sm:$0xff]
    %v1149 = vld [vmem:[#allocation7 + $0x310] sm:$0xff]
    %v1150 = vld [vmem:[#allocation7 + $0x318] sm:$0xff]
    %v1151 = vld [vmem:[#allocation7 + $0x320] sm:$0xff]
    %v1152 = vld [vmem:[#allocation7 + $0x328] sm:$0xff]
    %v1153 = vld [vmem:[#allocation7 + $0x330] sm:$0xff]
    %v1154 = vld [vmem:[#allocation7 + $0x338] sm:$0xff]
    %v1155 = vld [vmem:[#allocation7 + $0x340] sm:$0xff]
    %v1156 = vld [vmem:[#allocation7 + $0x348] sm:$0xff]
    %v1157 = vld [vmem:[#allocation7 + $0x350] sm:$0xff]
    %v1158 = vld [vmem:[#allocation7 + $0x358] sm:$0xff]
    %v1159 = vld [vmem:[#allocation7 + $0x360] sm:$0xff]
    %v1160 = vld [vmem:[#allocation7 + $0x368] sm:$0xff]
    %v1161 = vld [vmem:[#allocation7 + $0x370] sm:$0xff]
    %v1162 = vld [vmem:[#allocation7 + $0x378] sm:$0xff]
    %v1163 = vld [vmem:[#allocation7 + $0x380] sm:$0xff]
    %v1164 = vld [vmem:[#allocation7 + $0x388] sm:$0xff]
    %v1165 = vld [vmem:[#allocation7 + $0x390] sm:$0xff]
    %v1166 = vld [vmem:[#allocation7 + $0x398] sm:$0xff]
    %v1167 = vld [vmem:[#allocation7 + $0x3a0] sm:$0xff]
    %v1168 = vld [vmem:[#allocation7 + $0x3a8] sm:$0xff]
    %v1169 = vld [vmem:[#allocation7 + $0x3b0] sm:$0xff]
    %v1170 = vld [vmem:[#allocation7 + $0x3b8] sm:$0xff]
    %v1171 = vld [vmem:[#allocation7 + $0x3c0] sm:$0xff]
    %v1172 = vld [vmem:[#allocation7 + $0x3c8] sm:$0xff]
    %v1173 = vld [vmem:[#allocation7 + $0x3d0] sm:$0xff]
    %v1174 = vld [vmem:[#allocation7 + $0x3d8] sm:$0xff]
    %v1175 = vld [vmem:[#allocation7 + $0x3e0] sm:$0xff]
    %v1176 = vld [vmem:[#allocation7 + $0x3e8] sm:$0xff]
    %v1177 = vld [vmem:[#allocation7 + $0x3f0] sm:$0xff]
    %v1178 = vld [vmem:[#allocation7 + $0x3f8] sm:$0xff]
    %v1179 = vld [vmem:[%s4] sm:$0xf]
    %v1181 = vlaneseq
    %v1182 = vshrl.u32 %v1181, 7
    %v1183 = vsub.s32 0, %v1182
    %v1184 = vrot.slane %v1179, %v1183
    %v1185 = vlaneseq
    %v1186 = vshrl.u32 %v1185, 7
    %v1187 = vsub.s32 1, %v1186
    %v1188 = vrot.slane %v1179, %v1187
    %v1189 = vlaneseq
    %v1190 = vshrl.u32 %v1189, 7
    %v1191 = vsub.s32 2, %v1190
    %v1192 = vrot.slane %v1179, %v1191
    %v1193 = vlaneseq
    %v1194 = vshrl.u32 %v1193, 7
    %v1195 = vsub.s32 3, %v1194
    %v1196 = vrot.slane %v1179, %v1195
    %v1329 = vunpack.c.l.b16 %v1051
    %v1330 = vunpack.c.h.b16 %v1051
    %v1331 = vunpack.c.l.b16 %v1052
    %v1332 = vunpack.c.h.b16 %v1052
    %v1333 = vunpack.c.l.b16 %v1053
    %v1334 = vunpack.c.h.b16 %v1053
    %v1335 = vunpack.c.l.b16 %v1054
    %v1336 = vunpack.c.h.b16 %v1054
    %v1337 = vunpack.c.l.b16 %v1055
    %v1338 = vunpack.c.h.b16 %v1055
    %v1339 = vunpack.c.l.b16 %v1056
    %v1340 = vunpack.c.h.b16 %v1056
    %v1341 = vunpack.c.l.b16 %v1057
    %v1342 = vunpack.c.h.b16 %v1057
    %v1343 = vunpack.c.l.b16 %v1058
    %v1344 = vunpack.c.h.b16 %v1058
    %v1345 = vunpack.c.l.b16 %v1059
    %v1346 = vunpack.c.h.b16 %v1059
    %v1347 = vunpack.c.l.b16 %v1060
    %v1348 = vunpack.c.h.b16 %v1060
    %v1349 = vunpack.c.l.b16 %v1061
    %v1350 = vunpack.c.h.b16 %v1061
    %v1351 = vunpack.c.l.b16 %v1062
    %v1352 = vunpack.c.h.b16 %v1062
    %v1353 = vunpack.c.l.b16 %v1063
    %v1354 = vunpack.c.h.b16 %v1063
    %v1355 = vunpack.c.l.b16 %v1064
    %v1356 = vunpack.c.h.b16 %v1064
    %v1357 = vunpack.c.l.b16 %v1065
    %v1358 = vunpack.c.h.b16 %v1065
    %v1359 = vunpack.c.l.b16 %v1066
    %v1360 = vunpack.c.h.b16 %v1066
    %v1361 = vunpack.c.l.b16 %v1067
    %v1362 = vunpack.c.h.b16 %v1067
    %v1363 = vunpack.c.l.b16 %v1068
    %v1364 = vunpack.c.h.b16 %v1068
    %v1365 = vunpack.c.l.b16 %v1069
    %v1366 = vunpack.c.h.b16 %v1069
    %v1367 = vunpack.c.l.b16 %v1070
    %v1368 = vunpack.c.h.b16 %v1070
    %v1369 = vunpack.c.l.b16 %v1071
    %v1370 = vunpack.c.h.b16 %v1071
    %v1371 = vunpack.c.l.b16 %v1072
    %v1372 = vunpack.c.h.b16 %v1072
    %v1373 = vunpack.c.l.b16 %v1073
    %v1374 = vunpack.c.h.b16 %v1073
    %v1375 = vunpack.c.l.b16 %v1074
    %v1376 = vunpack.c.h.b16 %v1074
    %v1377 = vunpack.c.l.b16 %v1075
    %v1378 = vunpack.c.h.b16 %v1075
    %v1379 = vunpack.c.l.b16 %v1076
    %v1380 = vunpack.c.h.b16 %v1076
    %v1381 = vunpack.c.l.b16 %v1077
    %v1382 = vunpack.c.h.b16 %v1077
    %v1383 = vunpack.c.l.b16 %v1078
    %v1384 = vunpack.c.h.b16 %v1078
    %v1385 = vunpack.c.l.b16 %v1079
    %v1386 = vunpack.c.h.b16 %v1079
    %v1387 = vunpack.c.l.b16 %v1080
    %v1388 = vunpack.c.h.b16 %v1080
    %v1389 = vunpack.c.l.b16 %v1081
    %v1390 = vunpack.c.h.b16 %v1081
    %v1391 = vunpack.c.l.b16 %v1082
    %v1392 = vunpack.c.h.b16 %v1082
    %v1393 = vunpack.c.l.b16 %v1083
    %v1394 = vunpack.c.h.b16 %v1083
    %v1395 = vunpack.c.l.b16 %v1084
    %v1396 = vunpack.c.h.b16 %v1084
    %v1397 = vunpack.c.l.b16 %v1085
    %v1398 = vunpack.c.h.b16 %v1085
    %v1399 = vunpack.c.l.b16 %v1086
    %v1400 = vunpack.c.h.b16 %v1086
    %v1401 = vunpack.c.l.b16 %v1087
    %v1402 = vunpack.c.h.b16 %v1087
    %v1403 = vunpack.c.l.b16 %v1088
    %v1404 = vunpack.c.h.b16 %v1088
    %v1405 = vunpack.c.l.b16 %v1089
    %v1406 = vunpack.c.h.b16 %v1089
    %v1407 = vunpack.c.l.b16 %v1090
    %v1408 = vunpack.c.h.b16 %v1090
    %v1409 = vunpack.c.l.b16 %v1091
    %v1410 = vunpack.c.h.b16 %v1091
    %v1411 = vunpack.c.l.b16 %v1092
    %v1412 = vunpack.c.h.b16 %v1092
    %v1413 = vunpack.c.l.b16 %v1093
    %v1414 = vunpack.c.h.b16 %v1093
    %v1415 = vunpack.c.l.b16 %v1094
    %v1416 = vunpack.c.h.b16 %v1094
    %v1417 = vunpack.c.l.b16 %v1095
    %v1418 = vunpack.c.h.b16 %v1095
    %v1419 = vunpack.c.l.b16 %v1096
    %v1420 = vunpack.c.h.b16 %v1096
    %v1421 = vunpack.c.l.b16 %v1097
    %v1422 = vunpack.c.h.b16 %v1097
    %v1423 = vunpack.c.l.b16 %v1098
    %v1424 = vunpack.c.h.b16 %v1098
    %v1425 = vunpack.c.l.b16 %v1099
    %v1426 = vunpack.c.h.b16 %v1099
    %v1427 = vunpack.c.l.b16 %v1100
    %v1428 = vunpack.c.h.b16 %v1100
    %v1429 = vunpack.c.l.b16 %v1101
    %v1430 = vunpack.c.h.b16 %v1101
    %v1431 = vunpack.c.l.b16 %v1102
    %v1432 = vunpack.c.h.b16 %v1102
    %v1433 = vunpack.c.l.b16 %v1103
    %v1434 = vunpack.c.h.b16 %v1103
    %v1435 = vunpack.c.l.b16 %v1104
    %v1436 = vunpack.c.h.b16 %v1104
    %v1437 = vunpack.c.l.b16 %v1105
    %v1438 = vunpack.c.h.b16 %v1105
    %v1439 = vunpack.c.l.b16 %v1106
    %v1440 = vunpack.c.h.b16 %v1106
    %v1441 = vunpack.c.l.b16 %v1107
    %v1442 = vunpack.c.h.b16 %v1107
    %v1443 = vunpack.c.l.b16 %v1108
    %v1444 = vunpack.c.h.b16 %v1108
    %v1445 = vunpack.c.l.b16 %v1109
    %v1446 = vunpack.c.h.b16 %v1109
    %v1447 = vunpack.c.l.b16 %v1110
    %v1448 = vunpack.c.h.b16 %v1110
    %v1449 = vunpack.c.l.b16 %v1111
    %v1450 = vunpack.c.h.b16 %v1111
    %v1451 = vunpack.c.l.b16 %v1112
    %v1452 = vunpack.c.h.b16 %v1112
    %v1453 = vunpack.c.l.b16 %v1113
    %v1454 = vunpack.c.h.b16 %v1113
    %v1455 = vunpack.c.l.b16 %v1114
    %v1456 = vunpack.c.h.b16 %v1114
    %v1457 = vunpack.c.l.b16 %v1115
    %v1458 = vunpack.c.h.b16 %v1115
    %v1459 = vunpack.c.l.b16 %v1116
    %v1460 = vunpack.c.h.b16 %v1116
    %v1461 = vunpack.c.l.b16 %v1117
    %v1462 = vunpack.c.h.b16 %v1117
    %v1463 = vunpack.c.l.b16 %v1118
    %v1464 = vunpack.c.h.b16 %v1118
    %v1465 = vunpack.c.l.b16 %v1119
    %v1466 = vunpack.c.h.b16 %v1119
    %v1467 = vunpack.c.l.b16 %v1120
    %v1468 = vunpack.c.h.b16 %v1120
    %v1469 = vunpack.c.l.b16 %v1121
    %v1470 = vunpack.c.h.b16 %v1121
    %v1471 = vunpack.c.l.b16 %v1122
    %v1472 = vunpack.c.h.b16 %v1122
    %v1473 = vunpack.c.l.b16 %v1123
    %v1474 = vunpack.c.h.b16 %v1123
    %v1475 = vunpack.c.l.b16 %v1124
    %v1476 = vunpack.c.h.b16 %v1124
    %v1477 = vunpack.c.l.b16 %v1125
    %v1478 = vunpack.c.h.b16 %v1125
    %v1479 = vunpack.c.l.b16 %v1126
    %v1480 = vunpack.c.h.b16 %v1126
    %v1481 = vunpack.c.l.b16 %v1127
    %v1482 = vunpack.c.h.b16 %v1127
    %v1483 = vunpack.c.l.b16 %v1128
    %v1484 = vunpack.c.h.b16 %v1128
    %v1485 = vunpack.c.l.b16 %v1129
    %v1486 = vunpack.c.h.b16 %v1129
    %v1487 = vunpack.c.l.b16 %v1130
    %v1488 = vunpack.c.h.b16 %v1130
    %v1489 = vunpack.c.l.b16 %v1131
    %v1490 = vunpack.c.h.b16 %v1131
    %v1491 = vunpack.c.l.b16 %v1132
    %v1492 = vunpack.c.h.b16 %v1132
    %v1493 = vunpack.c.l.b16 %v1133
    %v1494 = vunpack.c.h.b16 %v1133
    %v1495 = vunpack.c.l.b16 %v1134
    %v1496 = vunpack.c.h.b16 %v1134
    %v1497 = vunpack.c.l.b16 %v1135
    %v1498 = vunpack.c.h.b16 %v1135
    %v1499 = vunpack.c.l.b16 %v1136
    %v1500 = vunpack.c.h.b16 %v1136
    %v1501 = vunpack.c.l.b16 %v1137
    %v1502 = vunpack.c.h.b16 %v1137
    %v1503 = vunpack.c.l.b16 %v1138
    %v1504 = vunpack.c.h.b16 %v1138
    %v1505 = vunpack.c.l.b16 %v1139
    %v1506 = vunpack.c.h.b16 %v1139
    %v1507 = vunpack.c.l.b16 %v1140
    %v1508 = vunpack.c.h.b16 %v1140
    %v1509 = vunpack.c.l.b16 %v1141
    %v1510 = vunpack.c.h.b16 %v1141
    %v1511 = vunpack.c.l.b16 %v1142
    %v1512 = vunpack.c.h.b16 %v1142
    %v1513 = vunpack.c.l.b16 %v1143
    %v1514 = vunpack.c.h.b16 %v1143
    %v1515 = vunpack.c.l.b16 %v1144
    %v1516 = vunpack.c.h.b16 %v1144
    %v1517 = vunpack.c.l.b16 %v1145
    %v1518 = vunpack.c.h.b16 %v1145
    %v1519 = vunpack.c.l.b16 %v1146
    %v1520 = vunpack.c.h.b16 %v1146
    %v1521 = vunpack.c.l.b16 %v1147
    %v1522 = vunpack.c.h.b16 %v1147
    %v1523 = vunpack.c.l.b16 %v1148
    %v1524 = vunpack.c.h.b16 %v1148
    %v1525 = vunpack.c.l.b16 %v1149
    %v1526 = vunpack.c.h.b16 %v1149
    %v1527 = vunpack.c.l.b16 %v1150
    %v1528 = vunpack.c.h.b16 %v1150
    %v1529 = vunpack.c.l.b16 %v1151
    %v1530 = vunpack.c.h.b16 %v1151
    %v1531 = vunpack.c.l.b16 %v1152
    %v1532 = vunpack.c.h.b16 %v1152
    %v1533 = vunpack.c.l.b16 %v1153
    %v1534 = vunpack.c.h.b16 %v1153
    %v1535 = vunpack.c.l.b16 %v1154
    %v1536 = vunpack.c.h.b16 %v1154
    %v1537 = vunpack.c.l.b16 %v1155
    %v1538 = vunpack.c.h.b16 %v1155
    %v1539 = vunpack.c.l.b16 %v1156
    %v1540 = vunpack.c.h.b16 %v1156
    %v1541 = vunpack.c.l.b16 %v1157
    %v1542 = vunpack.c.h.b16 %v1157
    %v1543 = vunpack.c.l.b16 %v1158
    %v1544 = vunpack.c.h.b16 %v1158
    %v1545 = vunpack.c.l.b16 %v1159
    %v1546 = vunpack.c.h.b16 %v1159
    %v1547 = vunpack.c.l.b16 %v1160
    %v1548 = vunpack.c.h.b16 %v1160
    %v1549 = vunpack.c.l.b16 %v1161
    %v1550 = vunpack.c.h.b16 %v1161
    %v1551 = vunpack.c.l.b16 %v1162
    %v1552 = vunpack.c.h.b16 %v1162
    %v1553 = vunpack.c.l.b16 %v1163
    %v1554 = vunpack.c.h.b16 %v1163
    %v1555 = vunpack.c.l.b16 %v1164
    %v1556 = vunpack.c.h.b16 %v1164
    %v1557 = vunpack.c.l.b16 %v1165
    %v1558 = vunpack.c.h.b16 %v1165
    %v1559 = vunpack.c.l.b16 %v1166
    %v1560 = vunpack.c.h.b16 %v1166
    %v1561 = vunpack.c.l.b16 %v1167
    %v1562 = vunpack.c.h.b16 %v1167
    %v1563 = vunpack.c.l.b16 %v1168
    %v1564 = vunpack.c.h.b16 %v1168
    %v1565 = vunpack.c.l.b16 %v1169
    %v1566 = vunpack.c.h.b16 %v1169
    %v1567 = vunpack.c.l.b16 %v1170
    %v1568 = vunpack.c.h.b16 %v1170
    %v1569 = vunpack.c.l.b16 %v1171
    %v1570 = vunpack.c.h.b16 %v1171
    %v1571 = vunpack.c.l.b16 %v1172
    %v1572 = vunpack.c.h.b16 %v1172
    %v1573 = vunpack.c.l.b16 %v1173
    %v1574 = vunpack.c.h.b16 %v1173
    %v1575 = vunpack.c.l.b16 %v1174
    %v1576 = vunpack.c.h.b16 %v1174
    %v1577 = vunpack.c.l.b16 %v1175
    %v1578 = vunpack.c.h.b16 %v1175
    %v1579 = vunpack.c.l.b16 %v1176
    %v1580 = vunpack.c.h.b16 %v1176
    %v1581 = vunpack.c.l.b16 %v1177
    %v1582 = vunpack.c.h.b16 %v1177
    %v1583 = vunpack.c.l.b16 %v1178
    %v1584 = vunpack.c.h.b16 %v1178
    %v1585 = vpack.c.b16 %v1333, %v1329
    %v1586 = vpack.c.b16 %v1334, %v1330
    %v1587 = vpack.c.b16 %v1335, %v1331
    %v1588 = vpack.c.b16 %v1336, %v1332
    %v1589 = vpack.c.b16 %v1341, %v1337
    %v1590 = vpack.c.b16 %v1342, %v1338
    %v1591 = vpack.c.b16 %v1343, %v1339
    %v1592 = vpack.c.b16 %v1344, %v1340
    %v1593 = vpack.c.b16 %v1349, %v1345
    %v1594 = vpack.c.b16 %v1350, %v1346
    %v1595 = vpack.c.b16 %v1351, %v1347
    %v1596 = vpack.c.b16 %v1352, %v1348
    %v1597 = vpack.c.b16 %v1357, %v1353
    %v1598 = vpack.c.b16 %v1358, %v1354
    %v1599 = vpack.c.b16 %v1359, %v1355
    %v1600 = vpack.c.b16 %v1360, %v1356
    %v1601 = vpack.c.b16 %v1365, %v1361
    %v1602 = vpack.c.b16 %v1366, %v1362
    %v1603 = vpack.c.b16 %v1367, %v1363
    %v1604 = vpack.c.b16 %v1368, %v1364
    %v1605 = vpack.c.b16 %v1373, %v1369
    %v1606 = vpack.c.b16 %v1374, %v1370
    %v1607 = vpack.c.b16 %v1375, %v1371
    %v1608 = vpack.c.b16 %v1376, %v1372
    %v1609 = vpack.c.b16 %v1381, %v1377
    %v1610 = vpack.c.b16 %v1382, %v1378
    %v1611 = vpack.c.b16 %v1383, %v1379
    %v1612 = vpack.c.b16 %v1384, %v1380
    %v1613 = vpack.c.b16 %v1389, %v1385
    %v1614 = vpack.c.b16 %v1390, %v1386
    %v1615 = vpack.c.b16 %v1391, %v1387
    %v1616 = vpack.c.b16 %v1392, %v1388
    %v1617 = vpack.c.b16 %v1397, %v1393
    %v1618 = vpack.c.b16 %v1398, %v1394
    %v1619 = vpack.c.b16 %v1399, %v1395
    %v1620 = vpack.c.b16 %v1400, %v1396
    %v1621 = vpack.c.b16 %v1405, %v1401
    %v1622 = vpack.c.b16 %v1406, %v1402
    %v1623 = vpack.c.b16 %v1407, %v1403
    %v1624 = vpack.c.b16 %v1408, %v1404
    %v1625 = vpack.c.b16 %v1413, %v1409
    %v1626 = vpack.c.b16 %v1414, %v1410
    %v1627 = vpack.c.b16 %v1415, %v1411
    %v1628 = vpack.c.b16 %v1416, %v1412
    %v1629 = vpack.c.b16 %v1421, %v1417
    %v1630 = vpack.c.b16 %v1422, %v1418
    %v1631 = vpack.c.b16 %v1423, %v1419
    %v1632 = vpack.c.b16 %v1424, %v1420
    %v1633 = vpack.c.b16 %v1429, %v1425
    %v1634 = vpack.c.b16 %v1430, %v1426
    %v1635 = vpack.c.b16 %v1431, %v1427
    %v1636 = vpack.c.b16 %v1432, %v1428
    %v1637 = vpack.c.b16 %v1437, %v1433
    %v1638 = vpack.c.b16 %v1438, %v1434
    %v1639 = vpack.c.b16 %v1439, %v1435
    %v1640 = vpack.c.b16 %v1440, %v1436
    %v1641 = vpack.c.b16 %v1445, %v1441
    %v1642 = vpack.c.b16 %v1446, %v1442
    %v1643 = vpack.c.b16 %v1447, %v1443
    %v1644 = vpack.c.b16 %v1448, %v1444
    %v1645 = vpack.c.b16 %v1453, %v1449
    %v1646 = vpack.c.b16 %v1454, %v1450
    %v1647 = vpack.c.b16 %v1455, %v1451
    %v1648 = vpack.c.b16 %v1456, %v1452
    %v1649 = vpack.c.b16 %v1461, %v1457
    %v1650 = vpack.c.b16 %v1462, %v1458
    %v1651 = vpack.c.b16 %v1463, %v1459
    %v1652 = vpack.c.b16 %v1464, %v1460
    %v1653 = vpack.c.b16 %v1469, %v1465
    %v1654 = vpack.c.b16 %v1470, %v1466
    %v1655 = vpack.c.b16 %v1471, %v1467
    %v1656 = vpack.c.b16 %v1472, %v1468
    %v1657 = vpack.c.b16 %v1477, %v1473
    %v1658 = vpack.c.b16 %v1478, %v1474
    %v1659 = vpack.c.b16 %v1479, %v1475
    %v1660 = vpack.c.b16 %v1480, %v1476
    %v1661 = vpack.c.b16 %v1485, %v1481
    %v1662 = vpack.c.b16 %v1486, %v1482
    %v1663 = vpack.c.b16 %v1487, %v1483
    %v1664 = vpack.c.b16 %v1488, %v1484
    %v1665 = vpack.c.b16 %v1493, %v1489
    %v1666 = vpack.c.b16 %v1494, %v1490
    %v1667 = vpack.c.b16 %v1495, %v1491
    %v1668 = vpack.c.b16 %v1496, %v1492
    %v1669 = vpack.c.b16 %v1501, %v1497
    %v1670 = vpack.c.b16 %v1502, %v1498
    %v1671 = vpack.c.b16 %v1503, %v1499
    %v1672 = vpack.c.b16 %v1504, %v1500
    %v1673 = vpack.c.b16 %v1509, %v1505
    %v1674 = vpack.c.b16 %v1510, %v1506
    %v1675 = vpack.c.b16 %v1511, %v1507
    %v1676 = vpack.c.b16 %v1512, %v1508
    %v1677 = vpack.c.b16 %v1517, %v1513
    %v1678 = vpack.c.b16 %v1518, %v1514
    %v1679 = vpack.c.b16 %v1519, %v1515
    %v1680 = vpack.c.b16 %v1520, %v1516
    %v1681 = vpack.c.b16 %v1525, %v1521
    %v1682 = vpack.c.b16 %v1526, %v1522
    %v1683 = vpack.c.b16 %v1527, %v1523
    %v1684 = vpack.c.b16 %v1528, %v1524
    %v1685 = vpack.c.b16 %v1533, %v1529
    %v1686 = vpack.c.b16 %v1534, %v1530
    %v1687 = vpack.c.b16 %v1535, %v1531
    %v1688 = vpack.c.b16 %v1536, %v1532
    %v1689 = vpack.c.b16 %v1541, %v1537
    %v1690 = vpack.c.b16 %v1542, %v1538
    %v1691 = vpack.c.b16 %v1543, %v1539
    %v1692 = vpack.c.b16 %v1544, %v1540
    %v1693 = vpack.c.b16 %v1549, %v1545
    %v1694 = vpack.c.b16 %v1550, %v1546
    %v1695 = vpack.c.b16 %v1551, %v1547
    %v1696 = vpack.c.b16 %v1552, %v1548
    %v1697 = vpack.c.b16 %v1557, %v1553
    %v1698 = vpack.c.b16 %v1558, %v1554
    %v1699 = vpack.c.b16 %v1559, %v1555
    %v1700 = vpack.c.b16 %v1560, %v1556
    %v1701 = vpack.c.b16 %v1565, %v1561
    %v1702 = vpack.c.b16 %v1566, %v1562
    %v1703 = vpack.c.b16 %v1567, %v1563
    %v1704 = vpack.c.b16 %v1568, %v1564
    %v1705 = vpack.c.b16 %v1573, %v1569
    %v1706 = vpack.c.b16 %v1574, %v1570
    %v1707 = vpack.c.b16 %v1575, %v1571
    %v1708 = vpack.c.b16 %v1576, %v1572
    %v1709 = vpack.c.b16 %v1581, %v1577
    %v1710 = vpack.c.b16 %v1582, %v1578
    %v1711 = vpack.c.b16 %v1583, %v1579
    %v1712 = vpack.c.b16 %v1584, %v1580
    %1841 = vmatprep.subr.bf16.mxu0 %v1586
    %1842 = vmatpush1.bf16.msra.mxu0 %v1585
    %1843 = vmatprep.subr.bf16.mxu0 %v1590
    %1844 = vmatpush1.bf16.msra.mxu0 %v1589
    %1845 = vmatprep.subr.bf16.mxu0 %v1594
    %1846 = vmatpush1.bf16.msra.mxu0 %v1593
    %1847 = vmatprep.subr.bf16.mxu0 %v1598
    %1848 = vmatpush1.bf16.msra.mxu0 %v1597
    %1849 = vmatprep.subr.bf16.mxu0 %v1602
    %1850 = vmatpush1.bf16.msra.mxu0 %v1601
    %1851 = vmatprep.subr.bf16.mxu0 %v1606
    %1852 = vmatpush1.bf16.msra.mxu0 %v1605
    %1853 = vmatprep.subr.bf16.mxu0 %v1610
    %1854 = vmatpush1.bf16.msra.mxu0 %v1609
    %1855 = vmatprep.subr.bf16.mxu0 %v1614
    %1856 = vmatpush1.bf16.msra.mxu0 %v1613
    %1857 = vmatprep.subr.bf16.mxu0 %v1618
    %1858 = vmatpush1.bf16.msra.mxu0 %v1617
    %1859 = vmatprep.subr.bf16.mxu0 %v1622
    %1860 = vmatpush1.bf16.msra.mxu0 %v1621
    %1861 = vmatprep.subr.bf16.mxu0 %v1626
    %1862 = vmatpush1.bf16.msra.mxu0 %v1625
    %1863 = vmatprep.subr.bf16.mxu0 %v1630
    %1864 = vmatpush1.bf16.msra.mxu0 %v1629
    %1865 = vmatprep.subr.bf16.mxu0 %v1634
    %1866 = vmatpush1.bf16.msra.mxu0 %v1633
    %1867 = vmatprep.subr.bf16.mxu0 %v1638
    %1868 = vmatpush1.bf16.msra.mxu0 %v1637
    %1869 = vmatprep.subr.bf16.mxu0 %v1642
    %1870 = vmatpush1.bf16.msra.mxu0 %v1641
    %1871 = vmatprep.subr.bf16.mxu0 %v1646
    %1872 = vmatpush1.bf16.msra.mxu0 %v1645
    %1873 = vmatprep.mubr.bf16.mxu0 %v1048
    %1874 = vmatmul.mubr.bf16.gmra.mrb[0].mxu0 %v1047
    %v1875 = vpop.f32.mrb[0].mxu0
    %v1876 = vadd.f32 %v1184, %v1875
    %v1877 = vpop.f32.mrb[0].mxu0
    %v1878 = vadd.f32 %v1188, %v1877
    %v1879 = vpop.f32.mrb[0].mxu0
    %v1880 = vpop.f32.mrb[0].mxu0
    %1881 = vdwg.mxu0
    %1882 = vmatprep.subr.bf16.mxu0 %v1650
    %1883 = vmatpush1.bf16.msra.mxu0 %v1649
    %1884 = vmatprep.subr.bf16.mxu0 %v1654
    %1885 = vmatpush1.bf16.msra.mxu0 %v1653
    %1886 = vmatprep.subr.bf16.mxu0 %v1658
    %1887 = vmatpush1.bf16.msra.mxu0 %v1657
    %1888 = vmatprep.subr.bf16.mxu0 %v1662
    %1889 = vmatpush1.bf16.msra.mxu0 %v1661
    %1890 = vmatprep.subr.bf16.mxu0 %v1666
    %1891 = vmatpush1.bf16.msra.mxu0 %v1665
    %1892 = vmatprep.subr.bf16.mxu0 %v1670
    %1893 = vmatpush1.bf16.msra.mxu0 %v1669
    %1894 = vmatprep.subr.bf16.mxu0 %v1674
    %1895 = vmatpush1.bf16.msra.mxu0 %v1673
    %1896 = vmatprep.subr.bf16.mxu0 %v1678
    %1897 = vmatpush1.bf16.msra.mxu0 %v1677
    %1898 = vmatprep.subr.bf16.mxu0 %v1682
    %1899 = vmatpush1.bf16.msra.mxu0 %v1681
    %1900 = vmatprep.subr.bf16.mxu0 %v1686
    %1901 = vmatpush1.bf16.msra.mxu0 %v1685
    %1902 = vmatprep.subr.bf16.mxu0 %v1690
    %1903 = vmatpush1.bf16.msra.mxu0 %v1689
    %1904 = vmatprep.subr.bf16.mxu0 %v1694
    %1905 = vmatpush1.bf16.msra.mxu0 %v1693
    %1906 = vmatprep.subr.bf16.mxu0 %v1698
    %1907 = vmatpush1.bf16.msra.mxu0 %v1697
    %1908 = vmatprep.subr.bf16.mxu0 %v1702
    %1909 = vmatpush1.bf16.msra.mxu0 %v1701
    %1910 = vmatprep.subr.bf16.mxu0 %v1706
    %1911 = vmatpush1.bf16.msra.mxu0 %v1705
    %1912 = vmatprep.subr.bf16.mxu0 %v1710
    %1913 = vmatpush1.bf16.msra.mxu0 %v1709
    %1914 = vmatprep.mubr.bf16.mxu0 %v1050
    %1915 = vmatmul.mubr.bf16.gmra.mrb[0].mxu0 %v1049
    %v1916 = vpop.f32.mrb[0].mxu0
    %v1917 = vadd.f32 %v1876, %v1916
    %v1918 = vpop.f32.mrb[0].mxu0
    %v1919 = vadd.f32 %v1878, %v1918
    %v1920 = vpop.f32.mrb[0].mxu0
    %v1921 = vpop.f32.mrb[0].mxu0
    %1922 = vdwg.mxu0
    %1923 = vmatprep.subr.bf16.mxu0 %v1588
    %1924 = vmatpush1.bf16.msra.mxu0 %v1587
    %1925 = vmatprep.subr.bf16.mxu0 %v1592
    %1926 = vmatpush1.bf16.msra.mxu0 %v1591
    %1927 = vmatprep.subr.bf16.mxu0 %v1596
    %1928 = vmatpush1.bf16.msra.mxu0 %v1595
    %1929 = vmatprep.subr.bf16.mxu0 %v1600
    %1930 = vmatpush1.bf16.msra.mxu0 %v1599
    %1931 = vmatprep.subr.bf16.mxu0 %v1604
    %1932 = vmatpush1.bf16.msra.mxu0 %v1603
    %1933 = vmatprep.subr.bf16.mxu0 %v1608
    %1934 = vmatpush1.bf16.msra.mxu0 %v1607
    %1935 = vmatprep.subr.bf16.mxu0 %v1612
    %1936 = vmatpush1.bf16.msra.mxu0 %v1611
    %1937 = vmatprep.subr.bf16.mxu0 %v1616
    %1938 = vmatpush1.bf16.msra.mxu0 %v1615
    %1939 = vmatprep.subr.bf16.mxu0 %v1620
    %1940 = vmatpush1.bf16.msra.mxu0 %v1619
    %1941 = vmatprep.subr.bf16.mxu0 %v1624
    %1942 = vmatpush1.bf16.msra.mxu0 %v1623
    %1943 = vmatprep.subr.bf16.mxu0 %v1628
    %1944 = vmatpush1.bf16.msra.mxu0 %v1627
    %1945 = vmatprep.subr.bf16.mxu0 %v1632
    %1946 = vmatpush1.bf16.msra.mxu0 %v1631
    %1947 = vmatprep.subr.bf16.mxu0 %v1636
    %1948 = vmatpush1.bf16.msra.mxu0 %v1635
    %1949 = vmatprep.subr.bf16.mxu0 %v1640
    %1950 = vmatpush1.bf16.msra.mxu0 %v1639
    %1951 = vmatprep.subr.bf16.mxu0 %v1644
    %1952 = vmatpush1.bf16.msra.mxu0 %v1643
    %1953 = vmatprep.subr.bf16.mxu0 %v1648
    %1954 = vmatpush1.bf16.msra.mxu0 %v1647
    %1955 = vmatprep.mubr.bf16.mxu0 %v1048
    %1956 = vmatmul.mubr.bf16.gmra.mrb[0].mxu0 %v1047
    %v1957 = vpop.f32.mrb[0].mxu0
    %v1958 = vadd.f32 %v1192, %v1957
    %v1959 = vpop.f32.mrb[0].mxu0
    %v1960 = vadd.f32 %v1196, %v1959
    %v1961 = vpop.f32.mrb[0].mxu0
    %v1962 = vpop.f32.mrb[0].mxu0
    %1963 = vdwg.mxu0
    %1964 = vmatprep.subr.bf16.mxu0 %v1652
    %1965 = vmatpush1.bf16.msra.mxu0 %v1651
    %1966 = vmatprep.subr.bf16.mxu0 %v1656
    %1967 = vmatpush1.bf16.msra.mxu0 %v1655
    %1968 = vmatprep.subr.bf16.mxu0 %v1660
    %1969 = vmatpush1.bf16.msra.mxu0 %v1659
    %1970 = vmatprep.subr.bf16.mxu0 %v1664
    %1971 = vmatpush1.bf16.msra.mxu0 %v1663
    %1972 = vmatprep.subr.bf16.mxu0 %v1668
    %1973 = vmatpush1.bf16.msra.mxu0 %v1667
    %1974 = vmatprep.subr.bf16.mxu0 %v1672
    %1975 = vmatpush1.bf16.msra.mxu0 %v1671
    %1976 = vmatprep.subr.bf16.mxu0 %v1676
    %1977 = vmatpush1.bf16.msra.mxu0 %v1675
    %1978 = vmatprep.subr.bf16.mxu0 %v1680
    %1979 = vmatpush1.bf16.msra.mxu0 %v1679
    %1980 = vmatprep.subr.bf16.mxu0 %v1684
    %1981 = vmatpush1.bf16.msra.mxu0 %v1683
    %1982 = vmatprep.subr.bf16.mxu0 %v1688
    %1983 = vmatpush1.bf16.msra.mxu0 %v1687
    %1984 = vmatprep.subr.bf16.mxu0 %v1692
    %1985 = vmatpush1.bf16.msra.mxu0 %v1691
    %1986 = vmatprep.subr.bf16.mxu0 %v1696
    %1987 = vmatpush1.bf16.msra.mxu0 %v1695
    %1988 = vmatprep.subr.bf16.mxu0 %v1700
    %1989 = vmatpush1.bf16.msra.mxu0 %v1699
    %1990 = vmatprep.subr.bf16.mxu0 %v1704
    %1991 = vmatpush1.bf16.msra.mxu0 %v1703
    %1992 = vmatprep.subr.bf16.mxu0 %v1708
    %1993 = vmatpush1.bf16.msra.mxu0 %v1707
    %1994 = vmatprep.subr.bf16.mxu0 %v1712
    %1995 = vmatpush1.bf16.msra.mxu0 %v1711
    %1996 = vmatprep.mubr.bf16.mxu0 %v1050
    %1997 = vmatmul.mubr.bf16.gmra.mrb[0].mxu0 %v1049
    %v1998 = vpop.f32.mrb[0].mxu0
    %v1999 = vadd.f32 %v1958, %v1998
    %v2000 = vpop.f32.mrb[0].mxu0
    %v2001 = vadd.f32 %v1960, %v2000
    %v2002 = vpop.f32.mrb[0].mxu0
    %v2003 = vpop.f32.mrb[0].mxu0
    %2004 = vdwg.mxu0
    %v2005 = vmax.f32 %v1917, 0.0
    %v2006 = vmax.f32 %v1919, 0.0
    %v2007 = vmax.f32 %v1999, 0.0
    %v2008 = vmax.f32 %v2001, 0.0
    %v2009 = vpack.c.bf16 %v2005, %v2005
    %v2010 = vpack.c.bf16 %v2006, %v2006
    %v2011 = vpack.c.bf16 %v2007, %v2007
    %v2012 = vpack.c.bf16 %v2008, %v2008
    %v2013 = vld [vmem:[#allocation8] sm:$0xf]
    %v2014 = vld [vmem:[#allocation8 + $0x4] sm:$0xf]
    %v2015 = vld [vmem:[#allocation8 + $0x8] sm:$0xf]
    %v2016 = vld [vmem:[#allocation8 + $0xc] sm:$0xf]
    %v2017 = vld [vmem:[#allocation8 + $0x10] sm:$0xf]
    %v2018 = vld [vmem:[#allocation8 + $0x14] sm:$0xf]
    %v2019 = vld [vmem:[#allocation8 + $0x18] sm:$0xf]
    %v2020 = vld [vmem:[#allocation8 + $0x1c] sm:$0xf]
    %v2021 = vld [vmem:[#allocation8 + $0x20] sm:$0xf]
    %v2022 = vld [vmem:[#allocation8 + $0x24] sm:$0xf]
    %v2023 = vld [vmem:[#allocation8 + $0x28] sm:$0xf]
    %v2024 = vld [vmem:[#allocation8 + $0x2c] sm:$0xf]
    %v2025 = vld [vmem:[#allocation8 + $0x30] sm:$0xf]
    %v2026 = vld [vmem:[#allocation8 + $0x34] sm:$0xf]
    %v2027 = vld [vmem:[#allocation8 + $0x38] sm:$0xf]
    %v2028 = vld [vmem:[#allocation8 + $0x3c] sm:$0xf]
    %v2029 = vld [vmem:[#allocation8 + $0x40] sm:$0xf]
    %v2030 = vld [vmem:[#allocation8 + $0x44] sm:$0xf]
    %v2031 = vld [vmem:[#allocation8 + $0x48] sm:$0xf]
    %v2032 = vld [vmem:[#allocation8 + $0x4c] sm:$0xf]
    %v2033 = vld [vmem:[#allocation8 + $0x50] sm:$0xf]
    %v2034 = vld [vmem:[#allocation8 + $0x54] sm:$0xf]
    %v2035 = vld [vmem:[#allocation8 + $0x58] sm:$0xf]
    %v2036 = vld [vmem:[#allocation8 + $0x5c] sm:$0xf]
    %v2037 = vld [vmem:[#allocation8 + $0x60] sm:$0xf]
    %v2038 = vld [vmem:[#allocation8 + $0x64] sm:$0xf]
    %v2039 = vld [vmem:[#allocation8 + $0x68] sm:$0xf]
    %v2040 = vld [vmem:[#allocation8 + $0x6c] sm:$0xf]
    %v2041 = vld [vmem:[#allocation8 + $0x70] sm:$0xf]
    %v2042 = vld [vmem:[#allocation8 + $0x74] sm:$0xf]
    %v2043 = vld [vmem:[#allocation8 + $0x78] sm:$0xf]
    %v2044 = vld [vmem:[#allocation8 + $0x7c] sm:$0xf]
    %v2045 = vld [vmem:[#allocation8 + $0x80] sm:$0xf]
    %v2046 = vld [vmem:[#allocation8 + $0x84] sm:$0xf]
    %v2047 = vld [vmem:[#allocation8 + $0x88] sm:$0xf]
    %v2048 = vld [vmem:[#allocation8 + $0x8c] sm:$0xf]
    %v2049 = vld [vmem:[#allocation8 + $0x90] sm:$0xf]
    %v2050 = vld [vmem:[#allocation8 + $0x94] sm:$0xf]
    %v2051 = vld [vmem:[#allocation8 + $0x98] sm:$0xf]
    %v2052 = vld [vmem:[#allocation8 + $0x9c] sm:$0xf]
    %v2053 = vld [vmem:[#allocation8 + $0xa0] sm:$0xf]
    %v2054 = vld [vmem:[#allocation8 + $0xa4] sm:$0xf]
    %v2055 = vld [vmem:[#allocation8 + $0xa8] sm:$0xf]
    %v2056 = vld [vmem:[#allocation8 + $0xac] sm:$0xf]
    %v2057 = vld [vmem:[#allocation8 + $0xb0] sm:$0xf]
    %v2058 = vld [vmem:[#allocation8 + $0xb4] sm:$0xf]
    %v2059 = vld [vmem:[#allocation8 + $0xb8] sm:$0xf]
    %v2060 = vld [vmem:[#allocation8 + $0xbc] sm:$0xf]
    %v2061 = vld [vmem:[#allocation8 + $0xc0] sm:$0xf]
    %v2062 = vld [vmem:[#allocation8 + $0xc4] sm:$0xf]
    %v2063 = vld [vmem:[#allocation8 + $0xc8] sm:$0xf]
    %v2064 = vld [vmem:[#allocation8 + $0xcc] sm:$0xf]
    %v2065 = vld [vmem:[#allocation8 + $0xd0] sm:$0xf]
    %v2066 = vld [vmem:[#allocation8 + $0xd4] sm:$0xf]
    %v2067 = vld [vmem:[#allocation8 + $0xd8] sm:$0xf]
    %v2068 = vld [vmem:[#allocation8 + $0xdc] sm:$0xf]
    %v2069 = vld [vmem:[#allocation8 + $0xe0] sm:$0xf]
    %v2070 = vld [vmem:[#allocation8 + $0xe4] sm:$0xf]
    %v2071 = vld [vmem:[#allocation8 + $0xe8] sm:$0xf]
    %v2072 = vld [vmem:[#allocation8 + $0xec] sm:$0xf]
    %v2073 = vld [vmem:[#allocation8 + $0xf0] sm:$0xf]
    %v2074 = vld [vmem:[#allocation8 + $0xf4] sm:$0xf]
    %v2075 = vld [vmem:[#allocation8 + $0xf8] sm:$0xf]
    %v2076 = vld [vmem:[#allocation8 + $0xfc] sm:$0xf]
    %v2077 = vld [vmem:[%s6] sm:$0x1]
    %v2079 = vlaneseq
    %v2080 = vshrl.u32 %v2079, 7
    %v2081 = vsub.s32 0, %v2080
    %v2082 = vrot.slane %v2077, %v2081
    %v2148 = vunpack.c.l.b16 %v2013
    %v2149 = vunpack.c.l.b16 %v2014
    %v2150 = vunpack.c.l.b16 %v2015
    %v2151 = vunpack.c.l.b16 %v2016
    %v2152 = vunpack.c.l.b16 %v2017
    %v2153 = vunpack.c.l.b16 %v2018
    %v2154 = vunpack.c.l.b16 %v2019
    %v2155 = vunpack.c.l.b16 %v2020
    %v2156 = vunpack.c.l.b16 %v2021
    %v2157 = vunpack.c.l.b16 %v2022
    %v2158 = vunpack.c.l.b16 %v2023
    %v2159 = vunpack.c.l.b16 %v2024
    %v2160 = vunpack.c.l.b16 %v2025
    %v2161 = vunpack.c.l.b16 %v2026
    %v2162 = vunpack.c.l.b16 %v2027
    %v2163 = vunpack.c.l.b16 %v2028
    %v2164 = vunpack.c.l.b16 %v2029
    %v2165 = vunpack.c.l.b16 %v2030
    %v2166 = vunpack.c.l.b16 %v2031
    %v2167 = vunpack.c.l.b16 %v2032
    %v2168 = vunpack.c.l.b16 %v2033
    %v2169 = vunpack.c.l.b16 %v2034
    %v2170 = vunpack.c.l.b16 %v2035
    %v2171 = vunpack.c.l.b16 %v2036
    %v2172 = vunpack.c.l.b16 %v2037
    %v2173 = vunpack.c.l.b16 %v2038
    %v2174 = vunpack.c.l.b16 %v2039
    %v2175 = vunpack.c.l.b16 %v2040
    %v2176 = vunpack.c.l.b16 %v2041
    %v2177 = vunpack.c.l.b16 %v2042
    %v2178 = vunpack.c.l.b16 %v2043
    %v2179 = vunpack.c.l.b16 %v2044
    %v2180 = vunpack.c.l.b16 %v2045
    %v2181 = vunpack.c.l.b16 %v2046
    %v2182 = vunpack.c.l.b16 %v2047
    %v2183 = vunpack.c.l.b16 %v2048
    %v2184 = vunpack.c.l.b16 %v2049
    %v2185 = vunpack.c.l.b16 %v2050
    %v2186 = vunpack.c.l.b16 %v2051
    %v2187 = vunpack.c.l.b16 %v2052
    %v2188 = vunpack.c.l.b16 %v2053
    %v2189 = vunpack.c.l.b16 %v2054
    %v2190 = vunpack.c.l.b16 %v2055
    %v2191 = vunpack.c.l.b16 %v2056
    %v2192 = vunpack.c.l.b16 %v2057
    %v2193 = vunpack.c.l.b16 %v2058
    %v2194 = vunpack.c.l.b16 %v2059
    %v2195 = vunpack.c.l.b16 %v2060
    %v2196 = vunpack.c.l.b16 %v2061
    %v2197 = vunpack.c.l.b16 %v2062
    %v2198 = vunpack.c.l.b16 %v2063
    %v2199 = vunpack.c.l.b16 %v2064
    %v2200 = vunpack.c.l.b16 %v2065
    %v2201 = vunpack.c.l.b16 %v2066
    %v2202 = vunpack.c.l.b16 %v2067
    %v2203 = vunpack.c.l.b16 %v2068
    %v2204 = vunpack.c.l.b16 %v2069
    %v2205 = vunpack.c.l.b16 %v2070
    %v2206 = vunpack.c.l.b16 %v2071
    %v2207 = vunpack.c.l.b16 %v2072
    %v2208 = vunpack.c.l.b16 %v2073
    %v2209 = vunpack.c.l.b16 %v2074
    %v2210 = vunpack.c.l.b16 %v2075
    %v2211 = vunpack.c.l.b16 %v2076
    %v2212 = vpack.c.b16 %v2149, %v2148
    %v2213 = vpack.c.b16 %v2151, %v2150
    %v2214 = vpack.c.b16 %v2153, %v2152
    %v2215 = vpack.c.b16 %v2155, %v2154
    %v2216 = vpack.c.b16 %v2157, %v2156
    %v2217 = vpack.c.b16 %v2159, %v2158
    %v2218 = vpack.c.b16 %v2161, %v2160
    %v2219 = vpack.c.b16 %v2163, %v2162
    %v2220 = vpack.c.b16 %v2165, %v2164
    %v2221 = vpack.c.b16 %v2167, %v2166
    %v2222 = vpack.c.b16 %v2169, %v2168
    %v2223 = vpack.c.b16 %v2171, %v2170
    %v2224 = vpack.c.b16 %v2173, %v2172
    %v2225 = vpack.c.b16 %v2175, %v2174
    %v2226 = vpack.c.b16 %v2177, %v2176
    %v2227 = vpack.c.b16 %v2179, %v2178
    %v2228 = vpack.c.b16 %v2181, %v2180
    %v2229 = vpack.c.b16 %v2183, %v2182
    %v2230 = vpack.c.b16 %v2185, %v2184
    %v2231 = vpack.c.b16 %v2187, %v2186
    %v2232 = vpack.c.b16 %v2189, %v2188
    %v2233 = vpack.c.b16 %v2191, %v2190
    %v2234 = vpack.c.b16 %v2193, %v2192
    %v2235 = vpack.c.b16 %v2195, %v2194
    %v2236 = vpack.c.b16 %v2197, %v2196
    %v2237 = vpack.c.b16 %v2199, %v2198
    %v2238 = vpack.c.b16 %v2201, %v2200
    %v2239 = vpack.c.b16 %v2203, %v2202
    %v2240 = vpack.c.b16 %v2205, %v2204
    %v2241 = vpack.c.b16 %v2207, %v2206
    %v2242 = vpack.c.b16 %v2209, %v2208
    %v2243 = vpack.c.b16 %v2211, %v2210
    %2276 = vmatprep.subr.bf16.mxu0 0
    %2277 = vmatpush1.bf16.msra.mxu0 %v2212
    %2278 = vmatprep.subr.bf16.mxu0 0
    %2279 = vmatpush1.bf16.msra.mxu0 %v2213
    %2280 = vmatprep.subr.bf16.mxu0 0
    %2281 = vmatpush1.bf16.msra.mxu0 %v2214
    %2282 = vmatprep.subr.bf16.mxu0 0
    %2283 = vmatpush1.bf16.msra.mxu0 %v2215
    %2284 = vmatprep.subr.bf16.mxu0 0
    %2285 = vmatpush1.bf16.msra.mxu0 %v2216
    %2286 = vmatprep.subr.bf16.mxu0 0
    %2287 = vmatpush1.bf16.msra.mxu0 %v2217
    %2288 = vmatprep.subr.bf16.mxu0 0
    %2289 = vmatpush1.bf16.msra.mxu0 %v2218
    %2290 = vmatprep.subr.bf16.mxu0 0
    %2291 = vmatpush1.bf16.msra.mxu0 %v2219
    %2292 = vmatprep.subr.bf16.mxu0 0
    %2293 = vmatpush1.bf16.msra.mxu0 %v2220
    %2294 = vmatprep.subr.bf16.mxu0 0
    %2295 = vmatpush1.bf16.msra.mxu0 %v2221
    %2296 = vmatprep.subr.bf16.mxu0 0
    %2297 = vmatpush1.bf16.msra.mxu0 %v2222
    %2298 = vmatprep.subr.bf16.mxu0 0
    %2299 = vmatpush1.bf16.msra.mxu0 %v2223
    %2300 = vmatprep.subr.bf16.mxu0 0
    %2301 = vmatpush1.bf16.msra.mxu0 %v2224
    %2302 = vmatprep.subr.bf16.mxu0 0
    %2303 = vmatpush1.bf16.msra.mxu0 %v2225
    %2304 = vmatprep.subr.bf16.mxu0 0
    %2305 = vmatpush1.bf16.msra.mxu0 %v2226
    %2306 = vmatprep.subr.bf16.mxu0 0
    %2307 = vmatpush1.bf16.msra.mxu0 %v2227
    %2308 = vmatprep.mubr.bf16.mxu0 %v2010
    %2309 = vmatmul.mubr.bf16.gmra.mrb[0].mxu0 %v2009
    %v2310 = vpop.f32.mrb[0].mxu0
    %v2311 = vadd.f32 %v2082, %v2310
    %v2312 = vpop.f32.mrb[0].mxu0
    %v2313 = vpop.f32.mrb[0].mxu0
    %v2314 = vpop.f32.mrb[0].mxu0
    %2315 = vdwg.mxu0
    %2316 = vmatprep.subr.bf16.mxu0 0
    %2317 = vmatpush1.bf16.msra.mxu0 %v2228
    %2318 = vmatprep.subr.bf16.mxu0 0
    %2319 = vmatpush1.bf16.msra.mxu0 %v2229
    %2320 = vmatprep.subr.bf16.mxu0 0
    %2321 = vmatpush1.bf16.msra.mxu0 %v2230
    %2322 = vmatprep.subr.bf16.mxu0 0
    %2323 = vmatpush1.bf16.msra.mxu0 %v2231
    %2324 = vmatprep.subr.bf16.mxu0 0
    %2325 = vmatpush1.bf16.msra.mxu0 %v2232
    %2326 = vmatprep.subr.bf16.mxu0 0
    %2327 = vmatpush1.bf16.msra.mxu0 %v2233
    %2328 = vmatprep.subr.bf16.mxu0 0
    %2329 = vmatpush1.bf16.msra.mxu0 %v2234
    %2330 = vmatprep.subr.bf16.mxu0 0
    %2331 = vmatpush1.bf16.msra.mxu0 %v2235
    %2332 = vmatprep.subr.bf16.mxu0 0
    %2333 = vmatpush1.bf16.msra.mxu0 %v2236
    %2334 = vmatprep.subr.bf16.mxu0 0
    %2335 = vmatpush1.bf16.msra.mxu0 %v2237
    %2336 = vmatprep.subr.bf16.mxu0 0
    %2337 = vmatpush1.bf16.msra.mxu0 %v2238
    %2338 = vmatprep.subr.bf16.mxu0 0
    %2339 = vmatpush1.bf16.msra.mxu0 %v2239
    %2340 = vmatprep.subr.bf16.mxu0 0
    %2341 = vmatpush1.bf16.msra.mxu0 %v2240
    %2342 = vmatprep.subr.bf16.mxu0 0
    %2343 = vmatpush1.bf16.msra.mxu0 %v2241
    %2344 = vmatprep.subr.bf16.mxu0 0
    %2345 = vmatpush1.bf16.msra.mxu0 %v2242
    %2346 = vmatprep.subr.bf16.mxu0 0
    %2347 = vmatpush1.bf16.msra.mxu0 %v2243
    %2348 = vmatprep.mubr.bf16.mxu0 %v2012
    %2349 = vmatmul.mubr.bf16.gmra.mrb[0].mxu0 %v2011
    %v2350 = vpop.f32.mrb[0].mxu0
    %v2351 = vadd.f32 %v2311, %v2350
    %v2352 = vpop.f32.mrb[0].mxu0
    %v2353 = vpop.f32.mrb[0].mxu0
    %v2354 = vpop.f32.mrb[0].mxu0
    %2355 = vdwg.mxu0
    %2356 = vst [vmem:[#allocation10] sm:$0xff] %v2351
    // Predicated region
    $region46: #{tpu_custom_call.1} parent=1 // pred_check
      _
    $region47: #{tpu_custom_call.1} parent=1 // pred_check_branch
      %2358 = sbr.rel (0) target = $region49
    $region48: #{tpu_custom_call.1} parent=1 // pred_region
      %s2360 = ssub.s32 128, 128
      %2361 = vsyncadd [#allocation4], %s2360
      %s2363 = sshll.u32 [#allocation10], 4
      %s2364 = int_to_ptr.vmem [resolvable:$true] %s2363
      %2366 = dma.vmem_to_hbm [thread:$0]  %s2364, 128, %s7, [#allocation4]
    $region49: #{tpu_custom_call.1} parent=1 // pred_fallthru
      _
    // Predicated region
    $region50: #{tpu_custom_call.1} parent=1 // pred_check
      _
    $region51: #{tpu_custom_call.1} parent=1 // pred_check_branch
      %2368 = sbr.rel (0) target = $region53
    $region52: #{tpu_custom_call.1} parent=1 // pred_region
      %2369 = dma.done [#allocation4], 128
    $region53: #{tpu_custom_call.1} parent=1 // pred_fallthru
      _
    %2370 = vsyncpa [#allocation3], 1
    %2371 = vsyncpa [#allocation6], 1
    %2372 = vsyncpa [#allocation9], 1
    %2373 = vsyncpa [#allocation4], 1

</llo_original>
